<compile_context>
chip_gen: v5e
topology: v5e:2x2
jax: 0.10.0
libtpu: 0.0.40
codegen_flags: <defaults>
</compile_context>

<pallas_src>
import jax
import jax.numpy as jnp
from jax.experimental import pallas as pl
from jax.experimental.pallas import tpu as pltpu

# Module-consistent small sizes (conf['seq_len'], input_len, conf['lstm_size'])
SEQ_LEN = 8
INPUT_LEN = 32
LSTM_SIZE = 32
GATE_LANES = 128          # lane width of one fused-gate tile


# ---------------------------------------------------------------------------
# Pallas kernel
# ---------------------------------------------------------------------------
def penet_kernel(x2_ref, mask_ref, wih_ref, bih_ref, whh_ref, wslab_ref, hp_ref,
                 out_ref, xg_ref, h_all_ref):
    T, Bt, D2 = x2_ref.shape
    H2 = h_all_ref.shape[-1]          # 2H (fwd | bwd)
    H = H2 // 2
    GW = GATE_LANES                   # 128

    # ---- Prologue: fused input projection for all steps & both directions.
    # x2 row t = [x_t | x_{T-1-t}]; r/z hidden biases are pre-folded into bih.
    x2 = x2_ref[...].reshape(T * Bt, D2)
    xg = jnp.dot(x2, wih_ref[...], preferred_element_type=jnp.float32) + bih_ref[...]
    xg_ref[...] = xg.reshape(T, Bt, 2 * GW)

    b_hn = hp_ref[4:5, :H2]           # (1, 2H) n-gate hidden bias (kept separate)

    # ---- Fused bi-directional GRU recurrence: T dependent steps, one MXU pass each.
    hcat = jnp.zeros((Bt, H2), jnp.float32)
    for s in range(T):                # static unroll, T == 8
        xs = xg_ref[s]                # (Bt, 256) dense time-major load
        hg = jnp.dot(hcat, whh_ref[...], preferred_element_type=jnp.float32)
        rz = jax.nn.sigmoid(xs[:, :GW] + hg[:, :GW])     # [r_f|r_b|z_f|z_b]
        r = rz[:, :H2]
        z = pltpu.roll(rz, H2, axis=1)[:, :H2]           # swap halves -> [z_f|z_b]
        n = jnp.tanh(xs[:, GW:GW + H2] + r * (hg[:, GW:GW + H2] + b_hn))
        hcat = (1.0 - z) * n + z * hcat
        h_all_ref[s] = hcat           # fwd half = time s, bwd half = time T-1-s

    # ---- Heads (epilogue). Backward-half time reversal is baked into wslab.
    proj = jnp.zeros((Bt, GW), jnp.float32)              # lanes 0..T-1: pe, T..2T-1: eij
    maxp = jnp.full((Bt, H2), -jnp.inf, jnp.float32)
    for s in range(T):
        h_s = h_all_ref[s]                               # (Bt, 2H)
        proj = proj + jnp.dot(h_s, wslab_ref[s], preferred_element_type=jnp.float32)
        maxp = jnp.maximum(maxp, h_s)

    att_b = hp_ref[5:6, :T]           # (1, T)
    pe_b = hp_ref[6:7, 0:1]           # (1, 1)
    npe_b = hp_ref[6:7, 1:2]          # (1, 1)

    eij = jnp.tanh(proj[:, T:2 * T] + att_b)             # (Bt, T)
    a = jnp.exp(eij) * mask_ref[...]
    a = a / jnp.sum(a, axis=1, keepdims=True) + 1e-10    # exact divide (torch parity)

    # attention pooling: full-lane-width scale built from lane masks (no half slices)
    lane64 = jax.lax.broadcasted_iota(jnp.int32, (1, H2), 1)
    sel_f = (lane64 < H).astype(jnp.float32)
    sel_b = 1.0 - sel_f
    att_pool = jnp.zeros((Bt, H2), jnp.float32)
    for s in range(T):
        scale = a[:, s:s + 1] * sel_f + a[:, T - 1 - s:T - s] * sel_b
        att_pool = att_pool + h_all_ref[s] * scale

    w_nmax = hp_ref[2:3, :H2]
    w_natt = hp_ref[3:4, :H2]
    logits_npe = jnp.sum(maxp * w_nmax + att_pool * w_natt,
                         axis=1, keepdims=True) + npe_b  # (Bt, 1)

    # ---- Single lane-dense output row: lanes [0:T) = pe logits, lane T = npe logit.
    lane128 = jax.lax.broadcasted_iota(jnp.int32, (1, GW), 1)
    row = jnp.where(lane128 < T, proj + pe_b, 0.0)
    row = jnp.where(lane128 == T, logits_npe, row)
    out_ref[...] = row


# ---------------------------------------------------------------------------
# Parameter fusion (pure-JAX wrapper glue)
# ---------------------------------------------------------------------------
def prepare_kernel_params(p, input_len, lstm_size, seq_len):
    D, H, T = input_len, lstm_size, seq_len
    H2 = 2 * H
    GW = GATE_LANES

    def gate(w, g):                   # (rows, 3H) -> gate g slice; order r|z|n
        return w[:, g * H:(g + 1) * H]

    # Fused gate packing:
    #   tile0 (lanes 0..127):  [r_fwd | r_bwd | z_fwd | z_bwd]
    #   tile1 (lanes 128..255): [n_fwd | n_bwd | pad]
    wih = jnp.zeros((2 * D, 2 * GW), jnp.float32)   # rows: [x | x_reversed]
    whh = jnp.zeros((H2, 2 * GW), jnp.float32)      # rows: [h_fwd | h_bwd]
    bih = jnp.zeros((1, 2 * GW), jnp.float32)
    col = {'r': 0, 'z': 2 * H, 'n': GW}
    gidx = {'r': 0, 'z': 1, 'n': 2}
    for gname, g in gidx.items():
        cf = col[gname]
        cb = cf + H
        wih = wih.at[:D, cf:cf + H].set(gate(p['wi_f_t'], g))
        wih = wih.at[D:, cb:cb + H].set(gate(p['wi_b_t'], g))
        whh = whh.at[:H, cf:cf + H].set(gate(p['wh_f_t'], g))
        whh = whh.at[H:, cb:cb + H].set(gate(p['wh_b_t'], g))
        bf = gate(p['bi_f'], g)[0]
        bb = gate(p['bi_b'], g)[0]
        if gname in ('r', 'z'):       # fold hidden biases of r/z into the prologue bias
            bf = bf + gate(p['bh_f'], g)[0]
            bb = bb + gate(p['bh_b'], g)[0]
        bih = bih.at[0, cf:cf + H].set(bf)
        bih = bih.at[0, cb:cb + H].set(bb)

    # Per-slab head weights: slab s contributes pe/att at true time s (fwd half)
    # and true time T-1-s (bwd half).  pe -> columns 0..T-1, att -> columns T..2T-1.
    pe_w = p['pe_w_t'][:, 0]
    att_w = p['att_w'][:, 0]
    wslab = jnp.zeros((T, H2, GW), jnp.float32)
    for s in range(T):
        wslab = wslab.at[s, :H, s].set(pe_w[:H])
        wslab = wslab.at[s, H:, T - 1 - s].set(pe_w[H:])
        wslab = wslab.at[s, :H, T + s].set(att_w[:H])
        wslab = wslab.at[s, H:, T + (T - 1 - s)].set(att_w[H:])

    # Merged small params in a single lane-dense (8,128) block.
    hp = jnp.zeros((8, GW), jnp.float32)
    hp = hp.at[2, :H2].set(p['npe_w_t'][:H2, 0])          # npe weight (max_pool half)
    hp = hp.at[3, :H2].set(p['npe_w_t'][H2:, 0])          # npe weight (att_pool half)
    hp = hp.at[4, :H].set(gate(p['bh_f'], 2)[0])          # b_hn forward
    hp = hp.at[4, H:H2].set(gate(p['bh_b'], 2)[0])        # b_hn backward
    hp = hp.at[5, :T].set(p['att_b'][0])                  # attention step bias
    hp = hp.at[6, 0].set(p['pe_b'][0, 0])
    hp = hp.at[6, 1].set(p['npe_b'][0, 0])

    return wih, bih, whh, wslab, hp


def _pick_batch_tile(bp):
    """Largest multiple-of-8 divisor of bp, capped at 256; prefer >= 2 grid steps."""
    bt = 8
    d = 8
    while d <= min(bp, 256):
        if bp % d == 0:
            bt = d
        d += 8
    if bp // bt < 2 and bt >= 16 and (bt // 2) % 8 == 0 and bp % (bt // 2) == 0:
        bt = bt // 2              # split so both v7x TensorCores get a grid step
    return bt


def penet_forward(x, mask, params):
    B, T, D = x.shape
    H = params['wh_f_t'].shape[0]
    H2 = 2 * H
    wih, bih, whh, wslab, hp = prepare_kernel_params(params, D, H, T)

    # Pad batch to a multiple of 8 (sublane tile); padded mask rows get 1s so the
    # softmax denominator never hits 0/0 in the dead rows.
    Bp = ((B + 7) // 8) * 8
    if Bp != B:
        x = jnp.concatenate([x, jnp.zeros((Bp - B, T, D), x.dtype)], axis=0)
        mask = jnp.concatenate([mask, jnp.ones((Bp - B, T), mask.dtype)], axis=0)

    # Time-major fused input: row t carries [x_t | x_{T-1-t}] (backward direction's
    # time reversal folded here).
    x2 = jnp.concatenate([x, jnp.flip(x, axis=1)], axis=-1)        # (Bp, T, 2D)
    x2 = jnp.transpose(x2, (1, 0, 2)).astype(jnp.float32)          # (T, Bp, 2D)
    mask = mask.astype(jnp.float32)

    bt = _pick_batch_tile(Bp)
    grid = (Bp // bt,)

    def full_spec(a):
        return pl.BlockSpec(a.shape, lambda b, _n=a.ndim: (0,) * _n)

    out = pl.pallas_call(
        penet_kernel,
        out_shape=jax.ShapeDtypeStruct((Bp, GATE_LANES), jnp.float32),
        grid=grid,
        in_specs=[
            pl.BlockSpec((T, bt, 2 * D), lambda b: (0, b, 0)),     # x2, time-major
            pl.BlockSpec((bt, T), lambda b: (b, 0)),               # mask
            full_spec(wih), full_spec(bih), full_spec(whh),
            full_spec(wslab), full_spec(hp),
        ],
        out_specs=pl.BlockSpec((bt, GATE_LANES), lambda b: (b, 0)),
        scratch_shapes=[
            pltpu.VMEM((T, bt, 2 * GATE_LANES), jnp.float32),      # precomputed input gates
            pltpu.VMEM((T, bt, H2), jnp.float32),                  # per-step hidden states
        ],
        compiler_params=pltpu.CompilerParams(dimension_semantics=("parallel",)),
    )(x2, mask, wih, bih, whh, wslab, hp)

    logits_pe = out[:B, :T, None]     # (B, T, 1)
    logits_npe = out[:B, T:T + 1]     # (B, 1)
    return logits_pe, logits_npe


# ---------------------------------------------------------------------------
# Pure-JAX reference (PyTorch semantics, un-fused parameters)
# ---------------------------------------------------------------------------
def _gru_direction(x, w_ih_t, w_hh_t, b_ih, b_hh, reverse):
    B, T, D = x.shape
    H = w_hh_t.shape[0]
    xg = (jnp.dot(x.reshape(B * T, D), w_ih_t) + b_ih[None, :]).reshape(B, T, 3 * H)
    h = jnp.zeros((B, H), jnp.float32)
    outs = [None] * T
    order = range(T - 1, -1, -1) if reverse else range(T)
    for tt in order:
        xg_t = xg[:, tt, :]
        hg = jnp.dot(h, w_hh_t) + b_hh[None, :]
        r = jax.nn.sigmoid(xg_t[:, :H] + hg[:, :H])
        z = jax.nn.sigmoid(xg_t[:, H:2 * H] + hg[:, H:2 * H])
        n = jnp.tanh(xg_t[:, 2 * H:] + r * hg[:, 2 * H:])
        h = (1.0 - z) * n + z * h
        outs[tt] = h
    return jnp.stack(outs, axis=1)


def penet_reference(x, mask, p):
    B, T, _ = x.shape
    out_f = _gru_direction(x, p['wi_f_t'], p['wh_f_t'], p['bi_f'][0], p['bh_f'][0], False)
    out_b = _gru_direction(x, p['wi_b_t'], p['wh_b_t'], p['bi_b'][0], p['bh_b'][0], True)
    h = jnp.concatenate([out_f, out_b], axis=-1)               # (B, T, 2H)
    F = h.shape[-1]

    logits_pe = (jnp.dot(h.reshape(B * T, F), p['pe_w_t']).reshape(B, T) + p['pe_b'])
    max_pool = jnp.max(h, axis=1)

    eij = jnp.dot(h.reshape(B * T, F), p['att_w']).reshape(B, T) + p['att_b']
    eij = jnp.tanh(eij)
    a = jnp.exp(eij) * mask
    a = a / jnp.sum(a, axis=1, keepdims=True) + 1e-10
    att_pool = jnp.sum(h * a[:, :, None], axis=1)

    conc = jnp.concatenate([max_pool, att_pool], axis=-1)
    logits_npe = jnp.dot(conc, p['npe_w_t']) + p['npe_b']
    return logits_pe[..., None], logits_npe


# ---------------------------------------------------------------------------
# Deterministic parameter init (shapes per nn.GRU / nn.Linear / Attention)
# ---------------------------------------------------------------------------
def init_params(key, input_len, lstm_size, seq_len):
    H, D, T = lstm_size, input_len, seq_len
    ks = jax.random.split(key, 12)
    u = lambda k, shape, s: jax.random.uniform(k, shape, jnp.float32, -s, s)
    s = 1.0 / jnp.sqrt(H)
    return {
        'wi_f_t': u(ks[0], (D, 3 * H), s),
        'wh_f_t': u(ks[1], (H, 3 * H), s),
        'bi_f':   u(ks[2], (1, 3 * H), s),
        'bh_f':   u(ks[3], (1, 3 * H), s),
        'wi_b_t': u(ks[4], (D, 3 * H), s),
        'wh_b_t': u(ks[5], (H, 3 * H), s),
        'bi_b':   u(ks[6], (1, 3 * H), s),
        'bh_b':   u(ks[7], (1, 3 * H), s),
        'att_w':  u(ks[8], (2 * H, 1), jnp.sqrt(6.0 / (2 * H + 1))),
        'att_b':  jnp.zeros((1, T), jnp.float32),
        'pe_w_t': u(ks[9], (2 * H, 1), 1.0 / jnp.sqrt(2 * H)),
        'pe_b':   u(ks[10], (1, 1), 1.0 / jnp.sqrt(2 * H)),
        'npe_w_t': u(ks[11], (4 * H, 1), 1.0 / jnp.sqrt(4 * H)),
        'npe_b':  jnp.zeros((1, 1), jnp.float32),
    }


def _check(B, key, params, fwd):
    T, D = SEQ_LEN, INPUT_LEN
    kx, km = jax.random.split(key, 2)
    x = jax.random.normal(kx, (B, T, D), jnp.float32)
    mask = (jax.random.uniform(km, (B, T)) > 0.3).astype(jnp.float32)
    mask = mask.at[:, 0].set(1.0)     # guarantee non-empty mask per row (avoids 0/0)

    logits_pe, logits_npe = fwd(x, mask, params)
    jax.block_until_ready((logits_pe, logits_npe))

    ref_pe, ref_npe = penet_reference(x, mask, params)
    assert logits_pe.shape == (B, T, 1) and logits_npe.shape == (B, 1)
    assert jnp.max(jnp.abs(logits_pe - ref_pe)) < 5e-3
    assert jnp.max(jnp.abs(logits_npe - ref_npe)) < 5e-3


if __name__ == "__main__":
    key = jax.random.PRNGKey(0)
    k0, k1, kp = jax.random.split(key, 3)
    params = init_params(kp, INPUT_LEN, LSTM_SIZE, SEQ_LEN)

    fwd = jax.jit(penet_forward)
    _check(2, k0, params, fwd)        # exercises batch padding (B=2 -> Bp=8), 1 grid step
    _check(48, k1, params, fwd)       # exercises multi-step grid (bt=24, grid=(2,))

    print("KERNEL_OK")
</pallas_src>

<mosaic_0001>
module attributes {stable_mosaic.version = 11 : i64} {
  func.func @penet_kernel(%arg0: i32, %arg1: memref<8x8x64xf32, #tpu.memory_space<vmem>>, %arg2: memref<8x8xf32, #tpu.memory_space<vmem>>, %arg3: memref<64x256xf32, #tpu.memory_space<vmem>>, %arg4: memref<1x256xf32, #tpu.memory_space<vmem>>, %arg5: memref<64x256xf32, #tpu.memory_space<vmem>>, %arg6: memref<8x64x128xf32, #tpu.memory_space<vmem>>, %arg7: memref<8x128xf32, #tpu.memory_space<vmem>>, %arg8: memref<8x128xf32, #tpu.memory_space<vmem>>, %arg9: memref<8x8x256xf32, #tpu.memory_space<vmem>>, %arg10: memref<8x8x64xf32, #tpu.memory_space<vmem>>) attributes {dimension_semantics = [#tpu.dimension_semantics<parallel>], iteration_bounds = array<i64: 1>, scalar_prefetch = 0 : i64, scratch_operands = 2 : i64, tpu.core_type = #tpu.core_type<tc>, window_params = [{transform_indices = @transform_0, window_bounds = array<i64: 8, 8, 64>}, {transform_indices = @transform_1, window_bounds = array<i64: 8, 8>}, {pipeline_mode = #tpu.pipeline_mode<synchronous>, transform_indices = @transform_2, window_bounds = array<i64: 64, 256>}, {pipeline_mode = #tpu.pipeline_mode<synchronous>, transform_indices = @transform_3, window_bounds = array<i64: 1, 256>}, {pipeline_mode = #tpu.pipeline_mode<synchronous>, transform_indices = @transform_4, window_bounds = array<i64: 64, 256>}, {pipeline_mode = #tpu.pipeline_mode<synchronous>, transform_indices = @transform_5, window_bounds = array<i64: 8, 64, 128>}, {pipeline_mode = #tpu.pipeline_mode<synchronous>, transform_indices = @transform_6, window_bounds = array<i64: 8, 128>}, {transform_indices = @transform_7, window_bounds = array<i64: 8, 128>}]} {
    %c0 = arith.constant 0 : index
    %c0_0 = arith.constant 0 : index
    %c0_1 = arith.constant 0 : index
    %0 = vector.load %arg1[%c0, %c0_0, %c0_1] : memref<8x8x64xf32, #tpu.memory_space<vmem>>, vector<8x8x64xf32>
    %1 = vector.shape_cast %0 : vector<8x8x64xf32> to vector<64x64xf32>
    %c0_2 = arith.constant 0 : index
    %c0_3 = arith.constant 0 : index
    %2 = vector.load %arg3[%c0_2, %c0_3] : memref<64x256xf32, #tpu.memory_space<vmem>>, vector<64x256xf32>
    %cst = arith.constant dense<0.000000e+00> : vector<64x256xf32>
    %3 = tpu.matmul %1, %2, %cst {dimension_numbers = #tpu.dot_dimension_numbers<[1], [0], [0], [1], [0, 0, 1, 1], [], []>} : vector<64x64xf32>, vector<64x256xf32>, vector<64x256xf32> -> vector<64x256xf32>
    %c0_4 = arith.constant 0 : index
    %c0_5 = arith.constant 0 : index
    %4 = vector.load %arg4[%c0_4, %c0_5] : memref<1x256xf32, #tpu.memory_space<vmem>>, vector<1x256xf32>
    %5 = vector.broadcast %4 : vector<1x256xf32> to vector<64x256xf32>
    %6 = arith.addf %3, %5 : vector<64x256xf32>
    %7 = vector.shape_cast %6 : vector<64x256xf32> to vector<8x8x256xf32>
    %c0_6 = arith.constant 0 : index
    %c0_7 = arith.constant 0 : index
    %c0_8 = arith.constant 0 : index
    %8 = vector.load %arg9[%c0_6, %c0_7, %c0_8] : memref<8x8x256xf32, #tpu.memory_space<vmem>>, vector<8x8x256xf32>
    tpu.vector_store %arg9[%c0_6, %c0_7, %c0_8], %7 {strides = array<i32>} : memref<8x8x256xf32, #tpu.memory_space<vmem>>, vector<8x8x256xf32>,
    %c4 = arith.constant 4 : index
    %c0_9 = arith.constant 0 : index
    %9 = vector.load %arg7[%c4, %c0_9] : memref<8x128xf32, #tpu.memory_space<vmem>>, vector<1x64xf32>
    %cst_10 = arith.constant 0.000000e+00 : f32
    %10 = vector.broadcast %cst_10 : f32 to vector<8x64xf32>
    %c0_11 = arith.constant 0 : index
    %c0_12 = arith.constant 0 : index
    %c0_13 = arith.constant 0 : index
    %11 = vector.load %arg9[%c0_11, %c0_12, %c0_13] : memref<8x8x256xf32, #tpu.memory_space<vmem>>, vector<1x8x256xf32>
    %12 = vector.shape_cast %11 : vector<1x8x256xf32> to vector<8x256xf32>
    %c0_14 = arith.constant 0 : index
    %c0_15 = arith.constant 0 : index
    %13 = vector.load %arg5[%c0_14, %c0_15] : memref<64x256xf32, #tpu.memory_space<vmem>>, vector<64x256xf32>
    %cst_16 = arith.constant dense<0.000000e+00> : vector<8x256xf32>
    %14 = tpu.matmul %10, %13, %cst_16 {dimension_numbers = #tpu.dot_dimension_numbers<[1], [0], [0], [1], [0, 0, 1, 1], [], []>} : vector<8x64xf32>, vector<64x256xf32>, vector<8x256xf32> -> vector<8x256xf32>
    %15 = vector.extract_strided_slice %12 {offsets = [0, 0], sizes = [8, 128], strides = [1, 1]} : vector<8x256xf32> to vector<8x128xf32>
    %16 = vector.extract_strided_slice %14 {offsets = [0, 0], sizes = [8, 128], strides = [1, 1]} : vector<8x256xf32> to vector<8x128xf32>
    %17 = arith.addf %15, %16 : vector<8x128xf32>
    %18 = arith.negf %17 : vector<8x128xf32>
    %19 = math.exp %18 : vector<8x128xf32>
    %cst_17 = arith.constant 1.000000e+00 : f32
    %20 = vector.broadcast %cst_17 : f32 to vector<8x128xf32>
    %21 = arith.addf %20, %19 : vector<8x128xf32>
    %22 = arith.divf %20, %21 : vector<8x128xf32>
    %23 = vector.extract_strided_slice %22 {offsets = [0, 0], sizes = [8, 64], strides = [1, 1]} : vector<8x128xf32> to vector<8x64xf32>
    %c64_i32 = arith.constant 64 : i32
    %24 = tpu.dynamic_rotate %22 by %c64_i32 dim 1 : vector<8x128xf32>, i32 -> vector<8x128xf32>
    %25 = vector.extract_strided_slice %24 {offsets = [0, 0], sizes = [8, 64], strides = [1, 1]} : vector<8x128xf32> to vector<8x64xf32>
    %26 = vector.extract_strided_slice %12 {offsets = [0, 128], sizes = [8, 64], strides = [1, 1]} : vector<8x256xf32> to vector<8x64xf32>
    %27 = vector.extract_strided_slice %14 {offsets = [0, 128], sizes = [8, 64], strides = [1, 1]} : vector<8x256xf32> to vector<8x64xf32>
    %28 = vector.broadcast %9 : vector<1x64xf32> to vector<8x64xf32>
    %29 = arith.addf %27, %28 : vector<8x64xf32>
    %30 = arith.mulf %23, %29 : vector<8x64xf32>
    %31 = arith.addf %26, %30 : vector<8x64xf32>
    %32 = math.tanh %31 : vector<8x64xf32>
    %cst_18 = arith.constant 1.000000e+00 : f32
    %33 = vector.broadcast %cst_18 : f32 to vector<8x64xf32>
    %34 = arith.subf %33, %25 : vector<8x64xf32>
    %35 = arith.mulf %34, %32 : vector<8x64xf32>
    %36 = arith.mulf %25, %10 : vector<8x64xf32>
    %37 = arith.addf %35, %36 : vector<8x64xf32>
    %c0_19 = arith.constant 0 : index
    %c0_20 = arith.constant 0 : index
    %c0_21 = arith.constant 0 : index
    %38 = vector.load %arg10[%c0_19, %c0_20, %c0_21] : memref<8x8x64xf32, #tpu.memory_space<vmem>>, vector<1x8x64xf32>
    %39 = vector.shape_cast %38 : vector<1x8x64xf32> to vector<8x64xf32>
    %40 = vector.shape_cast %37 : vector<8x64xf32> to vector<1x8x64xf32>
    tpu.vector_store %arg10[%c0_19, %c0_20, %c0_21], %40 {strides = array<i32>} : memref<8x8x64xf32, #tpu.memory_space<vmem>>, vector<1x8x64xf32>,
    %c1 = arith.constant 1 : index
    %c0_22 = arith.constant 0 : index
    %c0_23 = arith.constant 0 : index
    %41 = vector.load %arg9[%c1, %c0_22, %c0_23] : memref<8x8x256xf32, #tpu.memory_space<vmem>>, vector<1x8x256xf32>
    %42 = vector.shape_cast %41 : vector<1x8x256xf32> to vector<8x256xf32>
    %c0_24 = arith.constant 0 : index
    %c0_25 = arith.constant 0 : index
    %43 = vector.load %arg5[%c0_24, %c0_25] : memref<64x256xf32, #tpu.memory_space<vmem>>, vector<64x256xf32>
    %cst_26 = arith.constant dense<0.000000e+00> : vector<8x256xf32>
    %44 = tpu.matmul %37, %43, %cst_26 {dimension_numbers = #tpu.dot_dimension_numbers<[1], [0], [0], [1], [0, 0, 1, 1], [], []>} : vector<8x64xf32>, vector<64x256xf32>, vector<8x256xf32> -> vector<8x256xf32>
    %45 = vector.extract_strided_slice %42 {offsets = [0, 0], sizes = [8, 128], strides = [1, 1]} : vector<8x256xf32> to vector<8x128xf32>
    %46 = vector.extract_strided_slice %44 {offsets = [0, 0], sizes = [8, 128], strides = [1, 1]} : vector<8x256xf32> to vector<8x128xf32>
    %47 = arith.addf %45, %46 : vector<8x128xf32>
    %48 = arith.negf %47 : vector<8x128xf32>
    %49 = math.exp %48 : vector<8x128xf32>
    %cst_27 = arith.constant 1.000000e+00 : f32
    %50 = vector.broadcast %cst_27 : f32 to vector<8x128xf32>
    %51 = arith.addf %50, %49 : vector<8x128xf32>
    %52 = arith.divf %50, %51 : vector<8x128xf32>
    %53 = vector.extract_strided_slice %52 {offsets = [0, 0], sizes = [8, 64], strides = [1, 1]} : vector<8x128xf32> to vector<8x64xf32>
    %c64_i32_28 = arith.constant 64 : i32
    %54 = tpu.dynamic_rotate %52 by %c64_i32_28 dim 1 : vector<8x128xf32>, i32 -> vector<8x128xf32>
    %55 = vector.extract_strided_slice %54 {offsets = [0, 0], sizes = [8, 64], strides = [1, 1]} : vector<8x128xf32> to vector<8x64xf32>
    %56 = vector.extract_strided_slice %42 {offsets = [0, 128], sizes = [8, 64], strides = [1, 1]} : vector<8x256xf32> to vector<8x64xf32>
    %57 = vector.extract_strided_slice %44 {offsets = [0, 128], sizes = [8, 64], strides = [1, 1]} : vector<8x256xf32> to vector<8x64xf32>
    %58 = vector.broadcast %9 : vector<1x64xf32> to vector<8x64xf32>
    %59 = arith.addf %57, %58 : vector<8x64xf32>
    %60 = arith.mulf %53, %59 : vector<8x64xf32>
    %61 = arith.addf %56, %60 : vector<8x64xf32>
    %62 = math.tanh %61 : vector<8x64xf32>
    %cst_29 = arith.constant 1.000000e+00 : f32
    %63 = vector.broadcast %cst_29 : f32 to vector<8x64xf32>
    %64 = arith.subf %63, %55 : vector<8x64xf32>
    %65 = arith.mulf %64, %62 : vector<8x64xf32>
    %66 = arith.mulf %55, %37 : vector<8x64xf32>
    %67 = arith.addf %65, %66 : vector<8x64xf32>
    %c1_30 = arith.constant 1 : index
    %c0_31 = arith.constant 0 : index
    %c0_32 = arith.constant 0 : index
    %68 = vector.load %arg10[%c1_30, %c0_31, %c0_32] : memref<8x8x64xf32, #tpu.memory_space<vmem>>, vector<1x8x64xf32>
    %69 = vector.shape_cast %68 : vector<1x8x64xf32> to vector<8x64xf32>
    %70 = vector.shape_cast %67 : vector<8x64xf32> to vector<1x8x64xf32>
    tpu.vector_store %arg10[%c1_30, %c0_31, %c0_32], %70 {strides = array<i32>} : memref<8x8x64xf32, #tpu.memory_space<vmem>>, vector<1x8x64xf32>,
    %c2 = arith.constant 2 : index
    %c0_33 = arith.constant 0 : index
    %c0_34 = arith.constant 0 : index
    %71 = vector.load %arg9[%c2, %c0_33, %c0_34] : memref<8x8x256xf32, #tpu.memory_space<vmem>>, vector<1x8x256xf32>
    %72 = vector.shape_cast %71 : vector<1x8x256xf32> to vector<8x256xf32>
    %c0_35 = arith.constant 0 : index
    %c0_36 = arith.constant 0 : index
    %73 = vector.load %arg5[%c0_35, %c0_36] : memref<64x256xf32, #tpu.memory_space<vmem>>, vector<64x256xf32>
    %cst_37 = arith.constant dense<0.000000e+00> : vector<8x256xf32>
    %74 = tpu.matmul %67, %73, %cst_37 {dimension_numbers = #tpu.dot_dimension_numbers<[1], [0], [0], [1], [0, 0, 1, 1], [], []>} : vector<8x64xf32>, vector<64x256xf32>, vector<8x256xf32> -> vector<8x256xf32>
    %75 = vector.extract_strided_slice %72 {offsets = [0, 0], sizes = [8, 128], strides = [1, 1]} : vector<8x256xf32> to vector<8x128xf32>
    %76 = vector.extract_strided_slice %74 {offsets = [0, 0], sizes = [8, 128], strides = [1, 1]} : vector<8x256xf32> to vector<8x128xf32>
    %77 = arith.addf %75, %76 : vector<8x128xf32>
    %78 = arith.negf %77 : vector<8x128xf32>
    %79 = math.exp %78 : vector<8x128xf32>
    %cst_38 = arith.constant 1.000000e+00 : f32
    %80 = vector.broadcast %cst_38 : f32 to vector<8x128xf32>
    %81 = arith.addf %80, %79 : vector<8x128xf32>
    %82 = arith.divf %80, %81 : vector<8x128xf32>
    %83 = vector.extract_strided_slice %82 {offsets = [0, 0], sizes = [8, 64], strides = [1, 1]} : vector<8x128xf32> to vector<8x64xf32>
    %c64_i32_39 = arith.constant 64 : i32
    %84 = tpu.dynamic_rotate %82 by %c64_i32_39 dim 1 : vector<8x128xf32>, i32 -> vector<8x128xf32>
    %85 = vector.extract_strided_slice %84 {offsets = [0, 0], sizes = [8, 64], strides = [1, 1]} : vector<8x128xf32> to vector<8x64xf32>
    %86 = vector.extract_strided_slice %72 {offsets = [0, 128], sizes = [8, 64], strides = [1, 1]} : vector<8x256xf32> to vector<8x64xf32>
    %87 = vector.extract_strided_slice %74 {offsets = [0, 128], sizes = [8, 64], strides = [1, 1]} : vector<8x256xf32> to vector<8x64xf32>
    %88 = vector.broadcast %9 : vector<1x64xf32> to vector<8x64xf32>
    %89 = arith.addf %87, %88 : vector<8x64xf32>
    %90 = arith.mulf %83, %89 : vector<8x64xf32>
    %91 = arith.addf %86, %90 : vector<8x64xf32>
    %92 = math.tanh %91 : vector<8x64xf32>
    %cst_40 = arith.constant 1.000000e+00 : f32
    %93 = vector.broadcast %cst_40 : f32 to vector<8x64xf32>
    %94 = arith.subf %93, %85 : vector<8x64xf32>
    %95 = arith.mulf %94, %92 : vector<8x64xf32>
    %96 = arith.mulf %85, %67 : vector<8x64xf32>
    %97 = arith.addf %95, %96 : vector<8x64xf32>
    %c2_41 = arith.constant 2 : index
    %c0_42 = arith.constant 0 : index
    %c0_43 = arith.constant 0 : index
    %98 = vector.load %arg10[%c2_41, %c0_42, %c0_43] : memref<8x8x64xf32, #tpu.memory_space<vmem>>, vector<1x8x64xf32>
    %99 = vector.shape_cast %98 : vector<1x8x64xf32> to vector<8x64xf32>
    %100 = vector.shape_cast %97 : vector<8x64xf32> to vector<1x8x64xf32>
    tpu.vector_store %arg10[%c2_41, %c0_42, %c0_43], %100 {strides = array<i32>} : memref<8x8x64xf32, #tpu.memory_space<vmem>>, vector<1x8x64xf32>,
    %c3 = arith.constant 3 : index
    %c0_44 = arith.constant 0 : index
    %c0_45 = arith.constant 0 : index
    %101 = vector.load %arg9[%c3, %c0_44, %c0_45] : memref<8x8x256xf32, #tpu.memory_space<vmem>>, vector<1x8x256xf32>
    %102 = vector.shape_cast %101 : vector<1x8x256xf32> to vector<8x256xf32>
    %c0_46 = arith.constant 0 : index
    %c0_47 = arith.constant 0 : index
    %103 = vector.load %arg5[%c0_46, %c0_47] : memref<64x256xf32, #tpu.memory_space<vmem>>, vector<64x256xf32>
    %cst_48 = arith.constant dense<0.000000e+00> : vector<8x256xf32>
    %104 = tpu.matmul %97, %103, %cst_48 {dimension_numbers = #tpu.dot_dimension_numbers<[1], [0], [0], [1], [0, 0, 1, 1], [], []>} : vector<8x64xf32>, vector<64x256xf32>, vector<8x256xf32> -> vector<8x256xf32>
    %105 = vector.extract_strided_slice %102 {offsets = [0, 0], sizes = [8, 128], strides = [1, 1]} : vector<8x256xf32> to vector<8x128xf32>
    %106 = vector.extract_strided_slice %104 {offsets = [0, 0], sizes = [8, 128], strides = [1, 1]} : vector<8x256xf32> to vector<8x128xf32>
    %107 = arith.addf %105, %106 : vector<8x128xf32>
    %108 = arith.negf %107 : vector<8x128xf32>
    %109 = math.exp %108 : vector<8x128xf32>
    %cst_49 = arith.constant 1.000000e+00 : f32
    %110 = vector.broadcast %cst_49 : f32 to vector<8x128xf32>
    %111 = arith.addf %110, %109 : vector<8x128xf32>
    %112 = arith.divf %110, %111 : vector<8x128xf32>
    %113 = vector.extract_strided_slice %112 {offsets = [0, 0], sizes = [8, 64], strides = [1, 1]} : vector<8x128xf32> to vector<8x64xf32>
    %c64_i32_50 = arith.constant 64 : i32
    %114 = tpu.dynamic_rotate %112 by %c64_i32_50 dim 1 : vector<8x128xf32>, i32 -> vector<8x128xf32>
    %115 = vector.extract_strided_slice %114 {offsets = [0, 0], sizes = [8, 64], strides = [1, 1]} : vector<8x128xf32> to vector<8x64xf32>
    %116 = vector.extract_strided_slice %102 {offsets = [0, 128], sizes = [8, 64], strides = [1, 1]} : vector<8x256xf32> to vector<8x64xf32>
    %117 = vector.extract_strided_slice %104 {offsets = [0, 128], sizes = [8, 64], strides = [1, 1]} : vector<8x256xf32> to vector<8x64xf32>
    %118 = vector.broadcast %9 : vector<1x64xf32> to vector<8x64xf32>
    %119 = arith.addf %117, %118 : vector<8x64xf32>
    %120 = arith.mulf %113, %119 : vector<8x64xf32>
    %121 = arith.addf %116, %120 : vector<8x64xf32>
    %122 = math.tanh %121 : vector<8x64xf32>
    %cst_51 = arith.constant 1.000000e+00 : f32
    %123 = vector.broadcast %cst_51 : f32 to vector<8x64xf32>
    %124 = arith.subf %123, %115 : vector<8x64xf32>
    %125 = arith.mulf %124, %122 : vector<8x64xf32>
    %126 = arith.mulf %115, %97 : vector<8x64xf32>
    %127 = arith.addf %125, %126 : vector<8x64xf32>
    %c3_52 = arith.constant 3 : index
    %c0_53 = arith.constant 0 : index
    %c0_54 = arith.constant 0 : index
    %128 = vector.load %arg10[%c3_52, %c0_53, %c0_54] : memref<8x8x64xf32, #tpu.memory_space<vmem>>, vector<1x8x64xf32>
    %129 = vector.shape_cast %128 : vector<1x8x64xf32> to vector<8x64xf32>
    %130 = vector.shape_cast %127 : vector<8x64xf32> to vector<1x8x64xf32>
    tpu.vector_store %arg10[%c3_52, %c0_53, %c0_54], %130 {strides = array<i32>} : memref<8x8x64xf32, #tpu.memory_space<vmem>>, vector<1x8x64xf32>,
    %c4_55 = arith.constant 4 : index
    %c0_56 = arith.constant 0 : index
    %c0_57 = arith.constant 0 : index
    %131 = vector.load %arg9[%c4_55, %c0_56, %c0_57] : memref<8x8x256xf32, #tpu.memory_space<vmem>>, vector<1x8x256xf32>
    %132 = vector.shape_cast %131 : vector<1x8x256xf32> to vector<8x256xf32>
    %c0_58 = arith.constant 0 : index
    %c0_59 = arith.constant 0 : index
    %133 = vector.load %arg5[%c0_58, %c0_59] : memref<64x256xf32, #tpu.memory_space<vmem>>, vector<64x256xf32>
    %cst_60 = arith.constant dense<0.000000e+00> : vector<8x256xf32>
    %134 = tpu.matmul %127, %133, %cst_60 {dimension_numbers = #tpu.dot_dimension_numbers<[1], [0], [0], [1], [0, 0, 1, 1], [], []>} : vector<8x64xf32>, vector<64x256xf32>, vector<8x256xf32> -> vector<8x256xf32>
    %135 = vector.extract_strided_slice %132 {offsets = [0, 0], sizes = [8, 128], strides = [1, 1]} : vector<8x256xf32> to vector<8x128xf32>
    %136 = vector.extract_strided_slice %134 {offsets = [0, 0], sizes = [8, 128], strides = [1, 1]} : vector<8x256xf32> to vector<8x128xf32>
    %137 = arith.addf %135, %136 : vector<8x128xf32>
    %138 = arith.negf %137 : vector<8x128xf32>
    %139 = math.exp %138 : vector<8x128xf32>
    %cst_61 = arith.constant 1.000000e+00 : f32
    %140 = vector.broadcast %cst_61 : f32 to vector<8x128xf32>
    %141 = arith.addf %140, %139 : vector<8x128xf32>
    %142 = arith.divf %140, %141 : vector<8x128xf32>
    %143 = vector.extract_strided_slice %142 {offsets = [0, 0], sizes = [8, 64], strides = [1, 1]} : vector<8x128xf32> to vector<8x64xf32>
    %c64_i32_62 = arith.constant 64 : i32
    %144 = tpu.dynamic_rotate %142 by %c64_i32_62 dim 1 : vector<8x128xf32>, i32 -> vector<8x128xf32>
    %145 = vector.extract_strided_slice %144 {offsets = [0, 0], sizes = [8, 64], strides = [1, 1]} : vector<8x128xf32> to vector<8x64xf32>
    %146 = vector.extract_strided_slice %132 {offsets = [0, 128], sizes = [8, 64], strides = [1, 1]} : vector<8x256xf32> to vector<8x64xf32>
    %147 = vector.extract_strided_slice %134 {offsets = [0, 128], sizes = [8, 64], strides = [1, 1]} : vector<8x256xf32> to vector<8x64xf32>
    %148 = vector.broadcast %9 : vector<1x64xf32> to vector<8x64xf32>
    %149 = arith.addf %147, %148 : vector<8x64xf32>
    %150 = arith.mulf %143, %149 : vector<8x64xf32>
    %151 = arith.addf %146, %150 : vector<8x64xf32>
    %152 = math.tanh %151 : vector<8x64xf32>
    %cst_63 = arith.constant 1.000000e+00 : f32
    %153 = vector.broadcast %cst_63 : f32 to vector<8x64xf32>
    %154 = arith.subf %153, %145 : vector<8x64xf32>
    %155 = arith.mulf %154, %152 : vector<8x64xf32>
    %156 = arith.mulf %145, %127 : vector<8x64xf32>
    %157 = arith.addf %155, %156 : vector<8x64xf32>
    %c4_64 = arith.constant 4 : index
    %c0_65 = arith.constant 0 : index
    %c0_66 = arith.constant 0 : index
    %158 = vector.load %arg10[%c4_64, %c0_65, %c0_66] : memref<8x8x64xf32, #tpu.memory_space<vmem>>, vector<1x8x64xf32>
    %159 = vector.shape_cast %158 : vector<1x8x64xf32> to vector<8x64xf32>
    %160 = vector.shape_cast %157 : vector<8x64xf32> to vector<1x8x64xf32>
    tpu.vector_store %arg10[%c4_64, %c0_65, %c0_66], %160 {strides = array<i32>} : memref<8x8x64xf32, #tpu.memory_space<vmem>>, vector<1x8x64xf32>,
    %c5 = arith.constant 5 : index
    %c0_67 = arith.constant 0 : index
    %c0_68 = arith.constant 0 : index
    %161 = vector.load %arg9[%c5, %c0_67, %c0_68] : memref<8x8x256xf32, #tpu.memory_space<vmem>>, vector<1x8x256xf32>
    %162 = vector.shape_cast %161 : vector<1x8x256xf32> to vector<8x256xf32>
    %c0_69 = arith.constant 0 : index
    %c0_70 = arith.constant 0 : index
    %163 = vector.load %arg5[%c0_69, %c0_70] : memref<64x256xf32, #tpu.memory_space<vmem>>, vector<64x256xf32>
    %cst_71 = arith.constant dense<0.000000e+00> : vector<8x256xf32>
    %164 = tpu.matmul %157, %163, %cst_71 {dimension_numbers = #tpu.dot_dimension_numbers<[1], [0], [0], [1], [0, 0, 1, 1], [], []>} : vector<8x64xf32>, vector<64x256xf32>, vector<8x256xf32> -> vector<8x256xf32>
    %165 = vector.extract_strided_slice %162 {offsets = [0, 0], sizes = [8, 128], strides = [1, 1]} : vector<8x256xf32> to vector<8x128xf32>
    %166 = vector.extract_strided_slice %164 {offsets = [0, 0], sizes = [8, 128], strides = [1, 1]} : vector<8x256xf32> to vector<8x128xf32>
    %167 = arith.addf %165, %166 : vector<8x128xf32>
    %168 = arith.negf %167 : vector<8x128xf32>
    %169 = math.exp %168 : vector<8x128xf32>
    %cst_72 = arith.constant 1.000000e+00 : f32
    %170 = vector.broadcast %cst_72 : f32 to vector<8x128xf32>
    %171 = arith.addf %170, %169 : vector<8x128xf32>
    %172 = arith.divf %170, %171 : vector<8x128xf32>
    %173 = vector.extract_strided_slice %172 {offsets = [0, 0], sizes = [8, 64], strides = [1, 1]} : vector<8x128xf32> to vector<8x64xf32>
    %c64_i32_73 = arith.constant 64 : i32
    %174 = tpu.dynamic_rotate %172 by %c64_i32_73 dim 1 : vector<8x128xf32>, i32 -> vector<8x128xf32>
    %175 = vector.extract_strided_slice %174 {offsets = [0, 0], sizes = [8, 64], strides = [1, 1]} : vector<8x128xf32> to vector<8x64xf32>
    %176 = vector.extract_strided_slice %162 {offsets = [0, 128], sizes = [8, 64], strides = [1, 1]} : vector<8x256xf32> to vector<8x64xf32>
    %177 = vector.extract_strided_slice %164 {offsets = [0, 128], sizes = [8, 64], strides = [1, 1]} : vector<8x256xf32> to vector<8x64xf32>
    %178 = vector.broadcast %9 : vector<1x64xf32> to vector<8x64xf32>
    %179 = arith.addf %177, %178 : vector<8x64xf32>
    %180 = arith.mulf %173, %179 : vector<8x64xf32>
    %181 = arith.addf %176, %180 : vector<8x64xf32>
    %182 = math.tanh %181 : vector<8x64xf32>
    %cst_74 = arith.constant 1.000000e+00 : f32
    %183 = vector.broadcast %cst_74 : f32 to vector<8x64xf32>
    %184 = arith.subf %183, %175 : vector<8x64xf32>
    %185 = arith.mulf %184, %182 : vector<8x64xf32>
    %186 = arith.mulf %175, %157 : vector<8x64xf32>
    %187 = arith.addf %185, %186 : vector<8x64xf32>
    %c5_75 = arith.constant 5 : index
    %c0_76 = arith.constant 0 : index
    %c0_77 = arith.constant 0 : index
    %188 = vector.load %arg10[%c5_75, %c0_76, %c0_77] : memref<8x8x64xf32, #tpu.memory_space<vmem>>, vector<1x8x64xf32>
    %189 = vector.shape_cast %188 : vector<1x8x64xf32> to vector<8x64xf32>
    %190 = vector.shape_cast %187 : vector<8x64xf32> to vector<1x8x64xf32>
    tpu.vector_store %arg10[%c5_75, %c0_76, %c0_77], %190 {strides = array<i32>} : memref<8x8x64xf32, #tpu.memory_space<vmem>>, vector<1x8x64xf32>,
    %c6 = arith.constant 6 : index
    %c0_78 = arith.constant 0 : index
    %c0_79 = arith.constant 0 : index
    %191 = vector.load %arg9[%c6, %c0_78, %c0_79] : memref<8x8x256xf32, #tpu.memory_space<vmem>>, vector<1x8x256xf32>
    %192 = vector.shape_cast %191 : vector<1x8x256xf32> to vector<8x256xf32>
    %c0_80 = arith.constant 0 : index
    %c0_81 = arith.constant 0 : index
    %193 = vector.load %arg5[%c0_80, %c0_81] : memref<64x256xf32, #tpu.memory_space<vmem>>, vector<64x256xf32>
    %cst_82 = arith.constant dense<0.000000e+00> : vector<8x256xf32>
    %194 = tpu.matmul %187, %193, %cst_82 {dimension_numbers = #tpu.dot_dimension_numbers<[1], [0], [0], [1], [0, 0, 1, 1], [], []>} : vector<8x64xf32>, vector<64x256xf32>, vector<8x256xf32> -> vector<8x256xf32>
    %195 = vector.extract_strided_slice %192 {offsets = [0, 0], sizes = [8, 128], strides = [1, 1]} : vector<8x256xf32> to vector<8x128xf32>
    %196 = vector.extract_strided_slice %194 {offsets = [0, 0], sizes = [8, 128], strides = [1, 1]} : vector<8x256xf32> to vector<8x128xf32>
    %197 = arith.addf %195, %196 : vector<8x128xf32>
    %198 = arith.negf %197 : vector<8x128xf32>
    %199 = math.exp %198 : vector<8x128xf32>
    %cst_83 = arith.constant 1.000000e+00 : f32
    %200 = vector.broadcast %cst_83 : f32 to vector<8x128xf32>
    %201 = arith.addf %200, %199 : vector<8x128xf32>
    %202 = arith.divf %200, %201 : vector<8x128xf32>
    %203 = vector.extract_strided_slice %202 {offsets = [0, 0], sizes = [8, 64], strides = [1, 1]} : vector<8x128xf32> to vector<8x64xf32>
    %c64_i32_84 = arith.constant 64 : i32
    %204 = tpu.dynamic_rotate %202 by %c64_i32_84 dim 1 : vector<8x128xf32>, i32 -> vector<8x128xf32>
    %205 = vector.extract_strided_slice %204 {offsets = [0, 0], sizes = [8, 64], strides = [1, 1]} : vector<8x128xf32> to vector<8x64xf32>
    %206 = vector.extract_strided_slice %192 {offsets = [0, 128], sizes = [8, 64], strides = [1, 1]} : vector<8x256xf32> to vector<8x64xf32>
    %207 = vector.extract_strided_slice %194 {offsets = [0, 128], sizes = [8, 64], strides = [1, 1]} : vector<8x256xf32> to vector<8x64xf32>
    %208 = vector.broadcast %9 : vector<1x64xf32> to vector<8x64xf32>
    %209 = arith.addf %207, %208 : vector<8x64xf32>
    %210 = arith.mulf %203, %209 : vector<8x64xf32>
    %211 = arith.addf %206, %210 : vector<8x64xf32>
    %212 = math.tanh %211 : vector<8x64xf32>
    %cst_85 = arith.constant 1.000000e+00 : f32
    %213 = vector.broadcast %cst_85 : f32 to vector<8x64xf32>
    %214 = arith.subf %213, %205 : vector<8x64xf32>
    %215 = arith.mulf %214, %212 : vector<8x64xf32>
    %216 = arith.mulf %205, %187 : vector<8x64xf32>
    %217 = arith.addf %215, %216 : vector<8x64xf32>
    %c6_86 = arith.constant 6 : index
    %c0_87 = arith.constant 0 : index
    %c0_88 = arith.constant 0 : index
    %218 = vector.load %arg10[%c6_86, %c0_87, %c0_88] : memref<8x8x64xf32, #tpu.memory_space<vmem>>, vector<1x8x64xf32>
    %219 = vector.shape_cast %218 : vector<1x8x64xf32> to vector<8x64xf32>
    %220 = vector.shape_cast %217 : vector<8x64xf32> to vector<1x8x64xf32>
    tpu.vector_store %arg10[%c6_86, %c0_87, %c0_88], %220 {strides = array<i32>} : memref<8x8x64xf32, #tpu.memory_space<vmem>>, vector<1x8x64xf32>,
    %c7 = arith.constant 7 : index
    %c0_89 = arith.constant 0 : index
    %c0_90 = arith.constant 0 : index
    %221 = vector.load %arg9[%c7, %c0_89, %c0_90] : memref<8x8x256xf32, #tpu.memory_space<vmem>>, vector<1x8x256xf32>
    %222 = vector.shape_cast %221 : vector<1x8x256xf32> to vector<8x256xf32>
    %c0_91 = arith.constant 0 : index
    %c0_92 = arith.constant 0 : index
    %223 = vector.load %arg5[%c0_91, %c0_92] : memref<64x256xf32, #tpu.memory_space<vmem>>, vector<64x256xf32>
    %cst_93 = arith.constant dense<0.000000e+00> : vector<8x256xf32>
    %224 = tpu.matmul %217, %223, %cst_93 {dimension_numbers = #tpu.dot_dimension_numbers<[1], [0], [0], [1], [0, 0, 1, 1], [], []>} : vector<8x64xf32>, vector<64x256xf32>, vector<8x256xf32> -> vector<8x256xf32>
    %225 = vector.extract_strided_slice %222 {offsets = [0, 0], sizes = [8, 128], strides = [1, 1]} : vector<8x256xf32> to vector<8x128xf32>
    %226 = vector.extract_strided_slice %224 {offsets = [0, 0], sizes = [8, 128], strides = [1, 1]} : vector<8x256xf32> to vector<8x128xf32>
    %227 = arith.addf %225, %226 : vector<8x128xf32>
    %228 = arith.negf %227 : vector<8x128xf32>
    %229 = math.exp %228 : vector<8x128xf32>
    %cst_94 = arith.constant 1.000000e+00 : f32
    %230 = vector.broadcast %cst_94 : f32 to vector<8x128xf32>
    %231 = arith.addf %230, %229 : vector<8x128xf32>
    %232 = arith.divf %230, %231 : vector<8x128xf32>
    %233 = vector.extract_strided_slice %232 {offsets = [0, 0], sizes = [8, 64], strides = [1, 1]} : vector<8x128xf32> to vector<8x64xf32>
    %c64_i32_95 = arith.constant 64 : i32
    %234 = tpu.dynamic_rotate %232 by %c64_i32_95 dim 1 : vector<8x128xf32>, i32 -> vector<8x128xf32>
    %235 = vector.extract_strided_slice %234 {offsets = [0, 0], sizes = [8, 64], strides = [1, 1]} : vector<8x128xf32> to vector<8x64xf32>
    %236 = vector.extract_strided_slice %222 {offsets = [0, 128], sizes = [8, 64], strides = [1, 1]} : vector<8x256xf32> to vector<8x64xf32>
    %237 = vector.extract_strided_slice %224 {offsets = [0, 128], sizes = [8, 64], strides = [1, 1]} : vector<8x256xf32> to vector<8x64xf32>
    %238 = vector.broadcast %9 : vector<1x64xf32> to vector<8x64xf32>
    %239 = arith.addf %237, %238 : vector<8x64xf32>
    %240 = arith.mulf %233, %239 : vector<8x64xf32>
    %241 = arith.addf %236, %240 : vector<8x64xf32>
    %242 = math.tanh %241 : vector<8x64xf32>
    %cst_96 = arith.constant 1.000000e+00 : f32
    %243 = vector.broadcast %cst_96 : f32 to vector<8x64xf32>
    %244 = arith.subf %243, %235 : vector<8x64xf32>
    %245 = arith.mulf %244, %242 : vector<8x64xf32>
    %246 = arith.mulf %235, %217 : vector<8x64xf32>
    %247 = arith.addf %245, %246 : vector<8x64xf32>
    %c7_97 = arith.constant 7 : index
    %c0_98 = arith.constant 0 : index
    %c0_99 = arith.constant 0 : index
    %248 = vector.load %arg10[%c7_97, %c0_98, %c0_99] : memref<8x8x64xf32, #tpu.memory_space<vmem>>, vector<1x8x64xf32>
    %249 = vector.shape_cast %248 : vector<1x8x64xf32> to vector<8x64xf32>
    %250 = vector.shape_cast %247 : vector<8x64xf32> to vector<1x8x64xf32>
    tpu.vector_store %arg10[%c7_97, %c0_98, %c0_99], %250 {strides = array<i32>} : memref<8x8x64xf32, #tpu.memory_space<vmem>>, vector<1x8x64xf32>,
    %cst_100 = arith.constant 0.000000e+00 : f32
    %251 = vector.broadcast %cst_100 : f32 to vector<8x128xf32>
    %cst_101 = arith.constant 0xFF800000 : f32
    %252 = vector.broadcast %cst_101 : f32 to vector<8x64xf32>
    %c0_102 = arith.constant 0 : index
    %c0_103 = arith.constant 0 : index
    %c0_104 = arith.constant 0 : index
    %253 = vector.load %arg10[%c0_102, %c0_103, %c0_104] : memref<8x8x64xf32, #tpu.memory_space<vmem>>, vector<1x8x64xf32>
    %254 = vector.shape_cast %253 : vector<1x8x64xf32> to vector<8x64xf32>
    %c0_105 = arith.constant 0 : index
    %c0_106 = arith.constant 0 : index
    %c0_107 = arith.constant 0 : index
    %255 = vector.load %arg6[%c0_105, %c0_106, %c0_107] : memref<8x64x128xf32, #tpu.memory_space<vmem>>, vector<1x64x128xf32>
    %256 = vector.shape_cast %255 : vector<1x64x128xf32> to vector<64x128xf32>
    %cst_108 = arith.constant dense<0.000000e+00> : vector<8x128xf32>
    %257 = tpu.matmul %254, %256, %cst_108 {dimension_numbers = #tpu.dot_dimension_numbers<[1], [0], [0], [1], [0, 0, 1, 1], [], []>} : vector<8x64xf32>, vector<64x128xf32>, vector<8x128xf32> -> vector<8x128xf32>
    %258 = arith.addf %251, %257 : vector<8x128xf32>
    %259 = arith.maximumf %252, %254 : vector<8x64xf32>
    %c1_109 = arith.constant 1 : index
    %c0_110 = arith.constant 0 : index
    %c0_111 = arith.constant 0 : index
    %260 = vector.load %arg10[%c1_109, %c0_110, %c0_111] : memref<8x8x64xf32, #tpu.memory_space<vmem>>, vector<1x8x64xf32>
    %261 = vector.shape_cast %260 : vector<1x8x64xf32> to vector<8x64xf32>
    %c1_112 = arith.constant 1 : index
    %c0_113 = arith.constant 0 : index
    %c0_114 = arith.constant 0 : index
    %262 = vector.load %arg6[%c1_112, %c0_113, %c0_114] : memref<8x64x128xf32, #tpu.memory_space<vmem>>, vector<1x64x128xf32>
    %263 = vector.shape_cast %262 : vector<1x64x128xf32> to vector<64x128xf32>
    %cst_115 = arith.constant dense<0.000000e+00> : vector<8x128xf32>
    %264 = tpu.matmul %261, %263, %cst_115 {dimension_numbers = #tpu.dot_dimension_numbers<[1], [0], [0], [1], [0, 0, 1, 1], [], []>} : vector<8x64xf32>, vector<64x128xf32>, vector<8x128xf32> -> vector<8x128xf32>
    %265 = arith.addf %258, %264 : vector<8x128xf32>
    %266 = arith.maximumf %259, %261 : vector<8x64xf32>
    %c2_116 = arith.constant 2 : index
    %c0_117 = arith.constant 0 : index
    %c0_118 = arith.constant 0 : index
    %267 = vector.load %arg10[%c2_116, %c0_117, %c0_118] : memref<8x8x64xf32, #tpu.memory_space<vmem>>, vector<1x8x64xf32>
    %268 = vector.shape_cast %267 : vector<1x8x64xf32> to vector<8x64xf32>
    %c2_119 = arith.constant 2 : index
    %c0_120 = arith.constant 0 : index
    %c0_121 = arith.constant 0 : index
    %269 = vector.load %arg6[%c2_119, %c0_120, %c0_121] : memref<8x64x128xf32, #tpu.memory_space<vmem>>, vector<1x64x128xf32>
    %270 = vector.shape_cast %269 : vector<1x64x128xf32> to vector<64x128xf32>
    %cst_122 = arith.constant dense<0.000000e+00> : vector<8x128xf32>
    %271 = tpu.matmul %268, %270, %cst_122 {dimension_numbers = #tpu.dot_dimension_numbers<[1], [0], [0], [1], [0, 0, 1, 1], [], []>} : vector<8x64xf32>, vector<64x128xf32>, vector<8x128xf32> -> vector<8x128xf32>
    %272 = arith.addf %265, %271 : vector<8x128xf32>
    %273 = arith.maximumf %266, %268 : vector<8x64xf32>
    %c3_123 = arith.constant 3 : index
    %c0_124 = arith.constant 0 : index
    %c0_125 = arith.constant 0 : index
    %274 = vector.load %arg10[%c3_123, %c0_124, %c0_125] : memref<8x8x64xf32, #tpu.memory_space<vmem>>, vector<1x8x64xf32>
    %275 = vector.shape_cast %274 : vector<1x8x64xf32> to vector<8x64xf32>
    %c3_126 = arith.constant 3 : index
    %c0_127 = arith.constant 0 : index
    %c0_128 = arith.constant 0 : index
    %276 = vector.load %arg6[%c3_126, %c0_127, %c0_128] : memref<8x64x128xf32, #tpu.memory_space<vmem>>, vector<1x64x128xf32>
    %277 = vector.shape_cast %276 : vector<1x64x128xf32> to vector<64x128xf32>
    %cst_129 = arith.constant dense<0.000000e+00> : vector<8x128xf32>
    %278 = tpu.matmul %275, %277, %cst_129 {dimension_numbers = #tpu.dot_dimension_numbers<[1], [0], [0], [1], [0, 0, 1, 1], [], []>} : vector<8x64xf32>, vector<64x128xf32>, vector<8x128xf32> -> vector<8x128xf32>
    %279 = arith.addf %272, %278 : vector<8x128xf32>
    %280 = arith.maximumf %273, %275 : vector<8x64xf32>
    %c4_130 = arith.constant 4 : index
    %c0_131 = arith.constant 0 : index
    %c0_132 = arith.constant 0 : index
    %281 = vector.load %arg10[%c4_130, %c0_131, %c0_132] : memref<8x8x64xf32, #tpu.memory_space<vmem>>, vector<1x8x64xf32>
    %282 = vector.shape_cast %281 : vector<1x8x64xf32> to vector<8x64xf32>
    %c4_133 = arith.constant 4 : index
    %c0_134 = arith.constant 0 : index
    %c0_135 = arith.constant 0 : index
    %283 = vector.load %arg6[%c4_133, %c0_134, %c0_135] : memref<8x64x128xf32, #tpu.memory_space<vmem>>, vector<1x64x128xf32>
    %284 = vector.shape_cast %283 : vector<1x64x128xf32> to vector<64x128xf32>
    %cst_136 = arith.constant dense<0.000000e+00> : vector<8x128xf32>
    %285 = tpu.matmul %282, %284, %cst_136 {dimension_numbers = #tpu.dot_dimension_numbers<[1], [0], [0], [1], [0, 0, 1, 1], [], []>} : vector<8x64xf32>, vector<64x128xf32>, vector<8x128xf32> -> vector<8x128xf32>
    %286 = arith.addf %279, %285 : vector<8x128xf32>
    %287 = arith.maximumf %280, %282 : vector<8x64xf32>
    %c5_137 = arith.constant 5 : index
    %c0_138 = arith.constant 0 : index
    %c0_139 = arith.constant 0 : index
    %288 = vector.load %arg10[%c5_137, %c0_138, %c0_139] : memref<8x8x64xf32, #tpu.memory_space<vmem>>, vector<1x8x64xf32>
    %289 = vector.shape_cast %288 : vector<1x8x64xf32> to vector<8x64xf32>
    %c5_140 = arith.constant 5 : index
    %c0_141 = arith.constant 0 : index
    %c0_142 = arith.constant 0 : index
    %290 = vector.load %arg6[%c5_140, %c0_141, %c0_142] : memref<8x64x128xf32, #tpu.memory_space<vmem>>, vector<1x64x128xf32>
    %291 = vector.shape_cast %290 : vector<1x64x128xf32> to vector<64x128xf32>
    %cst_143 = arith.constant dense<0.000000e+00> : vector<8x128xf32>
    %292 = tpu.matmul %289, %291, %cst_143 {dimension_numbers = #tpu.dot_dimension_numbers<[1], [0], [0], [1], [0, 0, 1, 1], [], []>} : vector<8x64xf32>, vector<64x128xf32>, vector<8x128xf32> -> vector<8x128xf32>
    %293 = arith.addf %286, %292 : vector<8x128xf32>
    %294 = arith.maximumf %287, %289 : vector<8x64xf32>
    %c6_144 = arith.constant 6 : index
    %c0_145 = arith.constant 0 : index
    %c0_146 = arith.constant 0 : index
    %295 = vector.load %arg10[%c6_144, %c0_145, %c0_146] : memref<8x8x64xf32, #tpu.memory_space<vmem>>, vector<1x8x64xf32>
    %296 = vector.shape_cast %295 : vector<1x8x64xf32> to vector<8x64xf32>
    %c6_147 = arith.constant 6 : index
    %c0_148 = arith.constant 0 : index
    %c0_149 = arith.constant 0 : index
    %297 = vector.load %arg6[%c6_147, %c0_148, %c0_149] : memref<8x64x128xf32, #tpu.memory_space<vmem>>, vector<1x64x128xf32>
    %298 = vector.shape_cast %297 : vector<1x64x128xf32> to vector<64x128xf32>
    %cst_150 = arith.constant dense<0.000000e+00> : vector<8x128xf32>
    %299 = tpu.matmul %296, %298, %cst_150 {dimension_numbers = #tpu.dot_dimension_numbers<[1], [0], [0], [1], [0, 0, 1, 1], [], []>} : vector<8x64xf32>, vector<64x128xf32>, vector<8x128xf32> -> vector<8x128xf32>
    %300 = arith.addf %293, %299 : vector<8x128xf32>
    %301 = arith.maximumf %294, %296 : vector<8x64xf32>
    %c7_151 = arith.constant 7 : index
    %c0_152 = arith.constant 0 : index
    %c0_153 = arith.constant 0 : index
    %302 = vector.load %arg10[%c7_151, %c0_152, %c0_153] : memref<8x8x64xf32, #tpu.memory_space<vmem>>, vector<1x8x64xf32>
    %303 = vector.shape_cast %302 : vector<1x8x64xf32> to vector<8x64xf32>
    %c7_154 = arith.constant 7 : index
    %c0_155 = arith.constant 0 : index
    %c0_156 = arith.constant 0 : index
    %304 = vector.load %arg6[%c7_154, %c0_155, %c0_156] : memref<8x64x128xf32, #tpu.memory_space<vmem>>, vector<1x64x128xf32>
    %305 = vector.shape_cast %304 : vector<1x64x128xf32> to vector<64x128xf32>
    %cst_157 = arith.constant dense<0.000000e+00> : vector<8x128xf32>
    %306 = tpu.matmul %303, %305, %cst_157 {dimension_numbers = #tpu.dot_dimension_numbers<[1], [0], [0], [1], [0, 0, 1, 1], [], []>} : vector<8x64xf32>, vector<64x128xf32>, vector<8x128xf32> -> vector<8x128xf32>
    %307 = arith.addf %300, %306 : vector<8x128xf32>
    %308 = arith.maximumf %301, %303 : vector<8x64xf32>
    %c5_158 = arith.constant 5 : index
    %c0_159 = arith.constant 0 : index
    %309 = vector.load %arg7[%c5_158, %c0_159] : memref<8x128xf32, #tpu.memory_space<vmem>>, vector<1x8xf32>
    %c6_160 = arith.constant 6 : index
    %c0_161 = arith.constant 0 : index
    %310 = vector.load %arg7[%c6_160, %c0_161] : memref<8x128xf32, #tpu.memory_space<vmem>>, vector<1x1xf32>
    %c6_162 = arith.constant 6 : index
    %c1_163 = arith.constant 1 : index
    %311 = vector.load %arg7[%c6_162, %c1_163] : memref<8x128xf32, #tpu.memory_space<vmem>>, vector<1x1xf32>
    %312 = vector.extract_strided_slice %307 {offsets = [0, 8], sizes = [8, 8], strides = [1, 1]} : vector<8x128xf32> to vector<8x8xf32>
    %313 = vector.broadcast %309 : vector<1x8xf32> to vector<8x8xf32>
    %314 = arith.addf %312, %313 : vector<8x8xf32>
    %315 = math.tanh %314 : vector<8x8xf32>
    %316 = math.exp %315 : vector<8x8xf32>
    %c0_164 = arith.constant 0 : index
    %c0_165 = arith.constant 0 : index
    %317 = vector.load %arg2[%c0_164, %c0_165] : memref<8x8xf32, #tpu.memory_space<vmem>>, vector<8x8xf32>
    %318 = arith.mulf %316, %317 : vector<8x8xf32>
    %cst_166 = arith.constant dense<0.000000e+00> : vector<8xf32>
    %319 = vector.multi_reduction <add>, %318, %cst_166 [1] : vector<8x8xf32> to vector<8xf32>
    %320 = vector.shape_cast %319 : vector<8xf32> to vector<8x1xf32>
    %321 = vector.broadcast %320 : vector<8x1xf32> to vector<8x8xf32>
    %322 = arith.divf %318, %321 : vector<8x8xf32>
    %cst_167 = arith.constant 1.000000e-10 : f32
    %323 = vector.broadcast %cst_167 : f32 to vector<8x8xf32>
    %324 = arith.addf %322, %323 : vector<8x8xf32>
    %325 = tpu.iota {dimensions = array<i32: 1>} : vector<1x64xi32>
    %c32_i32 = arith.constant 32 : i32
    %326 = vector.broadcast %c32_i32 : i32 to vector<1x64xi32>
    %327 = arith.cmpi slt, %325, %326 : vector<1x64xi32>
    %328 = arith.extui %327 : vector<1x64xi1> to vector<1x64xi32>
    %329 = arith.sitofp %328 : vector<1x64xi32> to vector<1x64xf32>
    %cst_168 = arith.constant 1.000000e+00 : f32
    %330 = vector.broadcast %cst_168 : f32 to vector<1x64xf32>
    %331 = arith.subf %330, %329 : vector<1x64xf32>
    %cst_169 = arith.constant 0.000000e+00 : f32
    %332 = vector.broadcast %cst_169 : f32 to vector<8x64xf32>
    %333 = vector.extract_strided_slice %324 {offsets = [0, 0], sizes = [8, 1], strides = [1, 1]} : vector<8x8xf32> to vector<8x1xf32>
    %334 = vector.broadcast %333 : vector<8x1xf32> to vector<8x64xf32>
    %335 = vector.broadcast %329 : vector<1x64xf32> to vector<8x64xf32>
    %336 = arith.mulf %334, %335 : vector<8x64xf32>
    %337 = vector.extract_strided_slice %324 {offsets = [0, 7], sizes = [8, 1], strides = [1, 1]} : vector<8x8xf32> to vector<8x1xf32>
    %338 = vector.broadcast %337 : vector<8x1xf32> to vector<8x64xf32>
    %339 = vector.broadcast %331 : vector<1x64xf32> to vector<8x64xf32>
    %340 = arith.mulf %338, %339 : vector<8x64xf32>
    %341 = arith.addf %336, %340 : vector<8x64xf32>
    %c0_170 = arith.constant 0 : index
    %c0_171 = arith.constant 0 : index
    %c0_172 = arith.constant 0 : index
    %342 = vector.load %arg10[%c0_170, %c0_171, %c0_172] : memref<8x8x64xf32, #tpu.memory_space<vmem>>, vector<1x8x64xf32>
    %343 = vector.shape_cast %342 : vector<1x8x64xf32> to vector<8x64xf32>
    %344 = arith.mulf %343, %341 : vector<8x64xf32>
    %345 = arith.addf %332, %344 : vector<8x64xf32>
    %346 = vector.extract_strided_slice %324 {offsets = [0, 1], sizes = [8, 1], strides = [1, 1]} : vector<8x8xf32> to vector<8x1xf32>
    %347 = vector.broadcast %346 : vector<8x1xf32> to vector<8x64xf32>
    %348 = vector.broadcast %329 : vector<1x64xf32> to vector<8x64xf32>
    %349 = arith.mulf %347, %348 : vector<8x64xf32>
    %350 = vector.extract_strided_slice %324 {offsets = [0, 6], sizes = [8, 1], strides = [1, 1]} : vector<8x8xf32> to vector<8x1xf32>
    %351 = vector.broadcast %350 : vector<8x1xf32> to vector<8x64xf32>
    %352 = vector.broadcast %331 : vector<1x64xf32> to vector<8x64xf32>
    %353 = arith.mulf %351, %352 : vector<8x64xf32>
    %354 = arith.addf %349, %353 : vector<8x64xf32>
    %c1_173 = arith.constant 1 : index
    %c0_174 = arith.constant 0 : index
    %c0_175 = arith.constant 0 : index
    %355 = vector.load %arg10[%c1_173, %c0_174, %c0_175] : memref<8x8x64xf32, #tpu.memory_space<vmem>>, vector<1x8x64xf32>
    %356 = vector.shape_cast %355 : vector<1x8x64xf32> to vector<8x64xf32>
    %357 = arith.mulf %356, %354 : vector<8x64xf32>
    %358 = arith.addf %345, %357 : vector<8x64xf32>
    %359 = vector.extract_strided_slice %324 {offsets = [0, 2], sizes = [8, 1], strides = [1, 1]} : vector<8x8xf32> to vector<8x1xf32>
    %360 = vector.broadcast %359 : vector<8x1xf32> to vector<8x64xf32>
    %361 = vector.broadcast %329 : vector<1x64xf32> to vector<8x64xf32>
    %362 = arith.mulf %360, %361 : vector<8x64xf32>
    %363 = vector.extract_strided_slice %324 {offsets = [0, 5], sizes = [8, 1], strides = [1, 1]} : vector<8x8xf32> to vector<8x1xf32>
    %364 = vector.broadcast %363 : vector<8x1xf32> to vector<8x64xf32>
    %365 = vector.broadcast %331 : vector<1x64xf32> to vector<8x64xf32>
    %366 = arith.mulf %364, %365 : vector<8x64xf32>
    %367 = arith.addf %362, %366 : vector<8x64xf32>
    %c2_176 = arith.constant 2 : index
    %c0_177 = arith.constant 0 : index
    %c0_178 = arith.constant 0 : index
    %368 = vector.load %arg10[%c2_176, %c0_177, %c0_178] : memref<8x8x64xf32, #tpu.memory_space<vmem>>, vector<1x8x64xf32>
    %369 = vector.shape_cast %368 : vector<1x8x64xf32> to vector<8x64xf32>
    %370 = arith.mulf %369, %367 : vector<8x64xf32>
    %371 = arith.addf %358, %370 : vector<8x64xf32>
    %372 = vector.extract_strided_slice %324 {offsets = [0, 3], sizes = [8, 1], strides = [1, 1]} : vector<8x8xf32> to vector<8x1xf32>
    %373 = vector.broadcast %372 : vector<8x1xf32> to vector<8x64xf32>
    %374 = vector.broadcast %329 : vector<1x64xf32> to vector<8x64xf32>
    %375 = arith.mulf %373, %374 : vector<8x64xf32>
    %376 = vector.extract_strided_slice %324 {offsets = [0, 4], sizes = [8, 1], strides = [1, 1]} : vector<8x8xf32> to vector<8x1xf32>
    %377 = vector.broadcast %376 : vector<8x1xf32> to vector<8x64xf32>
    %378 = vector.broadcast %331 : vector<1x64xf32> to vector<8x64xf32>
    %379 = arith.mulf %377, %378 : vector<8x64xf32>
    %380 = arith.addf %375, %379 : vector<8x64xf32>
    %c3_179 = arith.constant 3 : index
    %c0_180 = arith.constant 0 : index
    %c0_181 = arith.constant 0 : index
    %381 = vector.load %arg10[%c3_179, %c0_180, %c0_181] : memref<8x8x64xf32, #tpu.memory_space<vmem>>, vector<1x8x64xf32>
    %382 = vector.shape_cast %381 : vector<1x8x64xf32> to vector<8x64xf32>
    %383 = arith.mulf %382, %380 : vector<8x64xf32>
    %384 = arith.addf %371, %383 : vector<8x64xf32>
    %385 = vector.extract_strided_slice %324 {offsets = [0, 4], sizes = [8, 1], strides = [1, 1]} : vector<8x8xf32> to vector<8x1xf32>
    %386 = vector.broadcast %385 : vector<8x1xf32> to vector<8x64xf32>
    %387 = vector.broadcast %329 : vector<1x64xf32> to vector<8x64xf32>
    %388 = arith.mulf %386, %387 : vector<8x64xf32>
    %389 = vector.extract_strided_slice %324 {offsets = [0, 3], sizes = [8, 1], strides = [1, 1]} : vector<8x8xf32> to vector<8x1xf32>
    %390 = vector.broadcast %389 : vector<8x1xf32> to vector<8x64xf32>
    %391 = vector.broadcast %331 : vector<1x64xf32> to vector<8x64xf32>
    %392 = arith.mulf %390, %391 : vector<8x64xf32>
    %393 = arith.addf %388, %392 : vector<8x64xf32>
    %c4_182 = arith.constant 4 : index
    %c0_183 = arith.constant 0 : index
    %c0_184 = arith.constant 0 : index
    %394 = vector.load %arg10[%c4_182, %c0_183, %c0_184] : memref<8x8x64xf32, #tpu.memory_space<vmem>>, vector<1x8x64xf32>
    %395 = vector.shape_cast %394 : vector<1x8x64xf32> to vector<8x64xf32>
    %396 = arith.mulf %395, %393 : vector<8x64xf32>
    %397 = arith.addf %384, %396 : vector<8x64xf32>
    %398 = vector.extract_strided_slice %324 {offsets = [0, 5], sizes = [8, 1], strides = [1, 1]} : vector<8x8xf32> to vector<8x1xf32>
    %399 = vector.broadcast %398 : vector<8x1xf32> to vector<8x64xf32>
    %400 = vector.broadcast %329 : vector<1x64xf32> to vector<8x64xf32>
    %401 = arith.mulf %399, %400 : vector<8x64xf32>
    %402 = vector.extract_strided_slice %324 {offsets = [0, 2], sizes = [8, 1], strides = [1, 1]} : vector<8x8xf32> to vector<8x1xf32>
    %403 = vector.broadcast %402 : vector<8x1xf32> to vector<8x64xf32>
    %404 = vector.broadcast %331 : vector<1x64xf32> to vector<8x64xf32>
    %405 = arith.mulf %403, %404 : vector<8x64xf32>
    %406 = arith.addf %401, %405 : vector<8x64xf32>
    %c5_185 = arith.constant 5 : index
    %c0_186 = arith.constant 0 : index
    %c0_187 = arith.constant 0 : index
    %407 = vector.load %arg10[%c5_185, %c0_186, %c0_187] : memref<8x8x64xf32, #tpu.memory_space<vmem>>, vector<1x8x64xf32>
    %408 = vector.shape_cast %407 : vector<1x8x64xf32> to vector<8x64xf32>
    %409 = arith.mulf %408, %406 : vector<8x64xf32>
    %410 = arith.addf %397, %409 : vector<8x64xf32>
    %411 = vector.extract_strided_slice %324 {offsets = [0, 6], sizes = [8, 1], strides = [1, 1]} : vector<8x8xf32> to vector<8x1xf32>
    %412 = vector.broadcast %411 : vector<8x1xf32> to vector<8x64xf32>
    %413 = vector.broadcast %329 : vector<1x64xf32> to vector<8x64xf32>
    %414 = arith.mulf %412, %413 : vector<8x64xf32>
    %415 = vector.extract_strided_slice %324 {offsets = [0, 1], sizes = [8, 1], strides = [1, 1]} : vector<8x8xf32> to vector<8x1xf32>
    %416 = vector.broadcast %415 : vector<8x1xf32> to vector<8x64xf32>
    %417 = vector.broadcast %331 : vector<1x64xf32> to vector<8x64xf32>
    %418 = arith.mulf %416, %417 : vector<8x64xf32>
    %419 = arith.addf %414, %418 : vector<8x64xf32>
    %c6_188 = arith.constant 6 : index
    %c0_189 = arith.constant 0 : index
    %c0_190 = arith.constant 0 : index
    %420 = vector.load %arg10[%c6_188, %c0_189, %c0_190] : memref<8x8x64xf32, #tpu.memory_space<vmem>>, vector<1x8x64xf32>
    %421 = vector.shape_cast %420 : vector<1x8x64xf32> to vector<8x64xf32>
    %422 = arith.mulf %421, %419 : vector<8x64xf32>
    %423 = arith.addf %410, %422 : vector<8x64xf32>
    %424 = vector.extract_strided_slice %324 {offsets = [0, 7], sizes = [8, 1], strides = [1, 1]} : vector<8x8xf32> to vector<8x1xf32>
    %425 = vector.broadcast %424 : vector<8x1xf32> to vector<8x64xf32>
    %426 = vector.broadcast %329 : vector<1x64xf32> to vector<8x64xf32>
    %427 = arith.mulf %425, %426 : vector<8x64xf32>
    %428 = vector.extract_strided_slice %324 {offsets = [0, 0], sizes = [8, 1], strides = [1, 1]} : vector<8x8xf32> to vector<8x1xf32>
    %429 = vector.broadcast %428 : vector<8x1xf32> to vector<8x64xf32>
    %430 = vector.broadcast %331 : vector<1x64xf32> to vector<8x64xf32>
    %431 = arith.mulf %429, %430 : vector<8x64xf32>
    %432 = arith.addf %427, %431 : vector<8x64xf32>
    %c7_191 = arith.constant 7 : index
    %c0_192 = arith.constant 0 : index
    %c0_193 = arith.constant 0 : index
    %433 = vector.load %arg10[%c7_191, %c0_192, %c0_193] : memref<8x8x64xf32, #tpu.memory_space<vmem>>, vector<1x8x64xf32>
    %434 = vector.shape_cast %433 : vector<1x8x64xf32> to vector<8x64xf32>
    %435 = arith.mulf %434, %432 : vector<8x64xf32>
    %436 = arith.addf %423, %435 : vector<8x64xf32>
    %c2_194 = arith.constant 2 : index
    %c0_195 = arith.constant 0 : index
    %437 = vector.load %arg7[%c2_194, %c0_195] : memref<8x128xf32, #tpu.memory_space<vmem>>, vector<1x64xf32>
    %c3_196 = arith.constant 3 : index
    %c0_197 = arith.constant 0 : index
    %438 = vector.load %arg7[%c3_196, %c0_197] : memref<8x128xf32, #tpu.memory_space<vmem>>, vector<1x64xf32>
    %439 = vector.broadcast %437 : vector<1x64xf32> to vector<8x64xf32>
    %440 = arith.mulf %308, %439 : vector<8x64xf32>
    %441 = vector.broadcast %438 : vector<1x64xf32> to vector<8x64xf32>
    %442 = arith.mulf %436, %441 : vector<8x64xf32>
    %443 = arith.addf %440, %442 : vector<8x64xf32>
    %cst_198 = arith.constant dense<0.000000e+00> : vector<8xf32>
    %444 = vector.multi_reduction <add>, %443, %cst_198 [1] : vector<8x64xf32> to vector<8xf32>
    %445 = vector.shape_cast %444 : vector<8xf32> to vector<8x1xf32>
    %446 = vector.broadcast %311 : vector<1x1xf32> to vector<8x1xf32>
    %447 = arith.addf %445, %446 : vector<8x1xf32>
    %448 = tpu.iota {dimensions = array<i32: 1>} : vector<1x128xi32>
    %c8_i32 = arith.constant 8 : i32
    %449 = vector.broadcast %c8_i32 : i32 to vector<1x128xi32>
    %450 = arith.cmpi slt, %448, %449 : vector<1x128xi32>
    %451 = vector.broadcast %310 : vector<1x1xf32> to vector<8x128xf32>
    %452 = arith.addf %307, %451 : vector<8x128xf32>
    %cst_199 = arith.constant 0.000000e+00 : f32
    %453 = vector.shape_cast %450 : vector<1x128xi1> to vector<1x128xi1>
    %454 = vector.broadcast %453 : vector<1x128xi1> to vector<8x128xi1>
    %455 = vector.broadcast %cst_199 : f32 to vector<8x128xf32>
    %456 = arith.select %454, %452, %455 : vector<8x128xi1>, vector<8x128xf32>
    %c8_i32_200 = arith.constant 8 : i32
    %457 = vector.broadcast %c8_i32_200 : i32 to vector<1x128xi32>
    %458 = arith.cmpi eq, %448, %457 : vector<1x128xi32>
    %459 = vector.shape_cast %458 : vector<1x128xi1> to vector<1x128xi1>
    %460 = vector.broadcast %459 : vector<1x128xi1> to vector<8x128xi1>
    %461 = vector.shape_cast %447 : vector<8x1xf32> to vector<8x1xf32>
    %462 = vector.broadcast %461 : vector<8x1xf32> to vector<8x128xf32>
    %463 = arith.select %460, %462, %456 : vector<8x128xi1>, vector<8x128xf32>
    %c0_201 = arith.constant 0 : index
    %c0_202 = arith.constant 0 : index
    %464 = vector.load %arg8[%c0_201, %c0_202] : memref<8x128xf32, #tpu.memory_space<vmem>>, vector<8x128xf32>
    tpu.vector_store %arg8[%c0_201, %c0_202], %463 {strides = array<i32>} : memref<8x128xf32, #tpu.memory_space<vmem>>, vector<8x128xf32>,
    return
  }
  func.func @transform_0(%arg0: i32) -> (i32, i32, i32) {
    %c0_i32 = arith.constant 0 : i32
    %c0_i32_0 = arith.constant 0 : i32
    %c0_i32_1 = arith.constant 0 : i32
    return %c0_i32, %arg0, %c0_i32_0 : i32, i32, i32
  }
  func.func @transform_1(%arg0: i32) -> (i32, i32) {
    %c0_i32 = arith.constant 0 : i32
    %c0_i32_0 = arith.constant 0 : i32
    return %arg0, %c0_i32 : i32, i32
  }
  func.func @transform_2(%arg0: i32) -> (i32, i32) {
    %c0_i32 = arith.constant 0 : i32
    %c0_i32_0 = arith.constant 0 : i32
    %c0_i32_1 = arith.constant 0 : i32
    return %c0_i32, %c0_i32_0 : i32, i32
  }
  func.func @transform_3(%arg0: i32) -> (i32, i32) {
    %c0_i32 = arith.constant 0 : i32
    %c0_i32_0 = arith.constant 0 : i32
    %c0_i32_1 = arith.constant 0 : i32
    return %c0_i32, %c0_i32_0 : i32, i32
  }
  func.func @transform_4(%arg0: i32) -> (i32, i32) {
    %c0_i32 = arith.constant 0 : i32
    %c0_i32_0 = arith.constant 0 : i32
    %c0_i32_1 = arith.constant 0 : i32
    return %c0_i32, %c0_i32_0 : i32, i32
  }
  func.func @transform_5(%arg0: i32) -> (i32, i32, i32) {
    %c0_i32 = arith.constant 0 : i32
    %c0_i32_0 = arith.constant 0 : i32
    %c0_i32_1 = arith.constant 0 : i32
    %c0_i32_2 = arith.constant 0 : i32
    return %c0_i32, %c0_i32_0, %c0_i32_1 : i32, i32, i32
  }
  func.func @transform_6(%arg0: i32) -> (i32, i32) {
    %c0_i32 = arith.constant 0 : i32
    %c0_i32_0 = arith.constant 0 : i32
    %c0_i32_1 = arith.constant 0 : i32
    return %c0_i32, %c0_i32_0 : i32, i32
  }
  func.func @transform_7(%arg0: i32) -> (i32, i32) {
    %c0_i32 = arith.constant 0 : i32
    %c0_i32_0 = arith.constant 0 : i32
    return %arg0, %c0_i32 : i32, i32
  }
}

</mosaic_0001>

<llo_original>
// kernel: penet_forward.1
$region0: #{penet_forward.1}
  #allocation0 [shape = 'u32[]', space=smem, size = 0x4, offset = 0x4, fixed_abs, tag = 'smem constant byte address 0x4 - core index']
  #allocation1 [shape = 'u32[72,128]{1,0:T(1,128)}', space=vmem, size = 0x9000, scoped, tag = 'internal scratch']
  #allocation2 [shape = 'f32[8,8,256]{2,1,0:T(8,128)}', space=vmem, size = 0x10000, scoped, tag = 'scratch operand']
  #allocation3 [shape = 'f32[8,8,64]{2,1,0:T(8,128)}', space=vmem, size = 0x8000, scoped, tag = 'scratch operand']
  %s0 = inlined_call_operand.vmem [shape: f32[8,8,64], index: 0, kind: input, shape index: {}]
  %s1 = inlined_call_operand.vmem [shape: f32[8,8], index: 1, kind: input, shape index: {}]
  %s2 = inlined_call_operand.vmem [shape: f32[64,256], index: 2, kind: input, shape index: {}]
  %s3 = inlined_call_operand.vmem [shape: f32[1,256], index: 3, kind: input, shape index: {}]
  %s4 = inlined_call_operand.vmem [shape: f32[64,256], index: 4, kind: input, shape index: {}]
  %s5 = inlined_call_operand.vmem [shape: f32[8,64,128], index: 5, kind: input, shape index: {}]
  %s6 = inlined_call_operand.vmem [shape: f32[8,128], index: 6, kind: input, shape index: {}]
  %s7 = inlined_call_operand.vmem [shape: f32[8,128], index: 7, kind: output, shape index: {}]
  %s8 = sld [smem:[#allocation0]]
  $region38: #{penet_forward.1} parent=0
    _
  %s10 = ssub.s32 1, %s8
  %s11 = scalar_select 0, %s10, %s8
  // Predicated region
  $region2: #{penet_forward.1} parent=0 // pred_check
    _
  $region3: #{penet_forward.1} parent=0 // pred_check_branch
    %13 = sbr.rel (0) target = $region5
  $region4: #{penet_forward.1} parent=0 // pred_region
    _
  $region5: #{penet_forward.1} parent=0 // pred_fallthru
    _
  // Predicated region
  $region6: #{penet_forward.1} parent=0 // pred_check
    _
  $region7: #{penet_forward.1} parent=0 // pred_check_branch
    %15 = sbr.rel (0) target = $region9
  $region8: #{penet_forward.1} parent=0 // pred_region
    _
  $region9: #{penet_forward.1} parent=0 // pred_fallthru
    _
  // Predicated region
  $region10: #{penet_forward.1} parent=0 // pred_check
    _
  $region11: #{penet_forward.1} parent=0 // pred_check_branch
    %17 = sbr.rel (0) target = $region13
  $region12: #{penet_forward.1} parent=0 // pred_region
    _
  $region13: #{penet_forward.1} parent=0 // pred_fallthru
    _
  // Predicated region
  $region14: #{penet_forward.1} parent=0 // pred_check
    _
  $region15: #{penet_forward.1} parent=0 // pred_check_branch
    %19 = sbr.rel (0) target = $region17
  $region16: #{penet_forward.1} parent=0 // pred_region
    _
  $region17: #{penet_forward.1} parent=0 // pred_fallthru
    _
  // Predicated region
  $region18: #{penet_forward.1} parent=0 // pred_check
    _
  $region19: #{penet_forward.1} parent=0 // pred_check_branch
    %21 = sbr.rel (0) target = $region21
  $region20: #{penet_forward.1} parent=0 // pred_region
    _
  $region21: #{penet_forward.1} parent=0 // pred_fallthru
    _
  // Predicated region
  $region22: #{penet_forward.1} parent=0 // pred_check
    _
  $region23: #{penet_forward.1} parent=0 // pred_check_branch
    %23 = sbr.rel (0) target = $region25
  $region24: #{penet_forward.1} parent=0 // pred_region
    _
  $region25: #{penet_forward.1} parent=0 // pred_fallthru
    _
  // Predicated region
  $region26: #{penet_forward.1} parent=0 // pred_check
    _
  $region27: #{penet_forward.1} parent=0 // pred_check_branch
    %25 = sbr.rel (0) target = $region29
  $region28: #{penet_forward.1} parent=0 // pred_region
    _
  $region29: #{penet_forward.1} parent=0 // pred_fallthru
    _
  %v26 = vld [vmem:[%s0] sm:$0xff]
  %v27 = vld [vmem:[%s0 + $0x8] sm:$0xff]
  %v28 = vld [vmem:[%s0 + $0x10] sm:$0xff]
  %v29 = vld [vmem:[%s0 + $0x18] sm:$0xff]
  %v30 = vld [vmem:[%s0 + $0x20] sm:$0xff]
  %v31 = vld [vmem:[%s0 + $0x28] sm:$0xff]
  %v32 = vld [vmem:[%s0 + $0x30] sm:$0xff]
  %v33 = vld [vmem:[%s0 + $0x38] sm:$0xff]
  %v34 = vld [vmem:[%s2] sm:$0xff]
  %v35 = vld [vmem:[%s2 + $0x8] sm:$0xff]
  %v36 = vld [vmem:[%s2 + $0x10] sm:$0xff]
  %v37 = vld [vmem:[%s2 + $0x18] sm:$0xff]
  %v38 = vld [vmem:[%s2 + $0x20] sm:$0xff]
  %v39 = vld [vmem:[%s2 + $0x28] sm:$0xff]
  %v40 = vld [vmem:[%s2 + $0x30] sm:$0xff]
  %v41 = vld [vmem:[%s2 + $0x38] sm:$0xff]
  %v42 = vld [vmem:[%s2 + $0x40] sm:$0xff]
  %v43 = vld [vmem:[%s2 + $0x48] sm:$0xff]
  %v44 = vld [vmem:[%s2 + $0x50] sm:$0xff]
  %v45 = vld [vmem:[%s2 + $0x58] sm:$0xff]
  %v46 = vld [vmem:[%s2 + $0x60] sm:$0xff]
  %v47 = vld [vmem:[%s2 + $0x68] sm:$0xff]
  %v48 = vld [vmem:[%s2 + $0x70] sm:$0xff]
  %v49 = vld [vmem:[%s2 + $0x78] sm:$0xff]
  %v50 = vld [vmem:[%s3] sm:$0x3]
  %v52 = vperm.slane %v50, 0
  %v53 = vperm.slane %v50, 1
  %vm56 = vcmask 523264
  %v58 = vsel %vm56, %v26, 0
  %v61 = vsel %vm56, %v27, 0
  %v64 = vsel %vm56, %v28, 0
  %v67 = vsel %vm56, %v29, 0
  %v70 = vsel %vm56, %v30, 0
  %v73 = vsel %vm56, %v31, 0
  %v76 = vsel %vm56, %v32, 0
  %v79 = vsel %vm56, %v33, 0
  %81 = vmatpush.msra.mxu0 0.0
  %82 = vmatpush.msra.mxu0 0.0
  %83 = vmatpush.msra.mxu0 0.0
  %84 = vmatpush.msra.mxu0 0.0
  %85 = vmatpush.msra.mxu0 0.0
  %86 = vmatpush.msra.mxu0 0.0
  %87 = vmatpush.msra.mxu0 0.0
  %88 = vmatpush.msra.mxu0 0.0
  %89 = vmatpush.msra.mxu0 %v48
  %90 = vmatpush.msra.mxu0 %v46
  %91 = vmatpush.msra.mxu0 %v44
  %92 = vmatpush.msra.mxu0 %v42
  %93 = vmatpush.msra.mxu0 %v40
  %94 = vmatpush.msra.mxu0 %v38
  %95 = vmatpush.msra.mxu0 %v36
  %96 = vmatpush.msra.mxu0 %v34
  %97 = vmatmul.f32.gmra.mxu0 %v58
  %v98 = vpop.f32.mrf.mxu0
  %v99 = vadd.f32 %v52, %v98
  %100 = vmatmul.f32.gmra.mxu0 %v61
  %v101 = vpop.f32.mrf.mxu0
  %v102 = vadd.f32 %v52, %v101
  %103 = vmatmul.f32.gmra.mxu0 %v64
  %v104 = vpop.f32.mrf.mxu0
  %v105 = vadd.f32 %v52, %v104
  %106 = vmatmul.f32.gmra.mxu0 %v67
  %v107 = vpop.f32.mrf.mxu0
  %v108 = vadd.f32 %v52, %v107
  %109 = vmatmul.f32.gmra.mxu0 %v70
  %v110 = vpop.f32.mrf.mxu0
  %v111 = vadd.f32 %v52, %v110
  %112 = vmatmul.f32.gmra.mxu0 %v73
  %v113 = vpop.f32.mrf.mxu0
  %v114 = vadd.f32 %v52, %v113
  %115 = vmatmul.f32.gmra.mxu0 %v76
  %v116 = vpop.f32.mrf.mxu0
  %v117 = vadd.f32 %v52, %v116
  %118 = vmatmul.f32.gmra.mxu0 %v79
  %v119 = vpop.f32.mrf.mxu0
  %v120 = vadd.f32 %v52, %v119
  %121 = vdwg.mxu0
  %122 = vmatpush.msra.mxu0 0.0
  %123 = vmatpush.msra.mxu0 0.0
  %124 = vmatpush.msra.mxu0 0.0
  %125 = vmatpush.msra.mxu0 0.0
  %126 = vmatpush.msra.mxu0 0.0
  %127 = vmatpush.msra.mxu0 0.0
  %128 = vmatpush.msra.mxu0 0.0
  %129 = vmatpush.msra.mxu0 0.0
  %130 = vmatpush.msra.mxu0 %v49
  %131 = vmatpush.msra.mxu0 %v47
  %132 = vmatpush.msra.mxu0 %v45
  %133 = vmatpush.msra.mxu0 %v43
  %134 = vmatpush.msra.mxu0 %v41
  %135 = vmatpush.msra.mxu0 %v39
  %136 = vmatpush.msra.mxu0 %v37
  %137 = vmatpush.msra.mxu0 %v35
  %138 = vmatmul.f32.gmra.mxu0 %v58
  %v139 = vpop.f32.mrf.mxu0
  %v140 = vadd.f32 %v53, %v139
  %141 = vmatmul.f32.gmra.mxu0 %v61
  %v142 = vpop.f32.mrf.mxu0
  %v143 = vadd.f32 %v53, %v142
  %144 = vmatmul.f32.gmra.mxu0 %v64
  %v145 = vpop.f32.mrf.mxu0
  %v146 = vadd.f32 %v53, %v145
  %147 = vmatmul.f32.gmra.mxu0 %v67
  %v148 = vpop.f32.mrf.mxu0
  %v149 = vadd.f32 %v53, %v148
  %150 = vmatmul.f32.gmra.mxu0 %v70
  %v151 = vpop.f32.mrf.mxu0
  %v152 = vadd.f32 %v53, %v151
  %153 = vmatmul.f32.gmra.mxu0 %v73
  %v154 = vpop.f32.mrf.mxu0
  %v155 = vadd.f32 %v53, %v154
  %156 = vmatmul.f32.gmra.mxu0 %v76
  %v157 = vpop.f32.mrf.mxu0
  %v158 = vadd.f32 %v53, %v157
  %159 = vmatmul.f32.gmra.mxu0 %v79
  %v160 = vpop.f32.mrf.mxu0
  %v161 = vadd.f32 %v53, %v160
  %162 = vdwg.mxu0
  %163 = vst [vmem:[#allocation2] sm:$0xff] %v99
  %164 = vst [vmem:[#allocation2 + $0x8] sm:$0xff] %v140
  %165 = vst [vmem:[#allocation2 + $0x10] sm:$0xff] %v102
  %166 = vst [vmem:[#allocation2 + $0x18] sm:$0xff] %v143
  %167 = vst [vmem:[#allocation2 + $0x20] sm:$0xff] %v105
  %168 = vst [vmem:[#allocation2 + $0x28] sm:$0xff] %v146
  %169 = vst [vmem:[#allocation2 + $0x30] sm:$0xff] %v108
  %170 = vst [vmem:[#allocation2 + $0x38] sm:$0xff] %v149
  %171 = vst [vmem:[#allocation2 + $0x40] sm:$0xff] %v111
  %172 = vst [vmem:[#allocation2 + $0x48] sm:$0xff] %v152
  %173 = vst [vmem:[#allocation2 + $0x50] sm:$0xff] %v114
  %174 = vst [vmem:[#allocation2 + $0x58] sm:$0xff] %v155
  %175 = vst [vmem:[#allocation2 + $0x60] sm:$0xff] %v117
  %176 = vst [vmem:[#allocation2 + $0x68] sm:$0xff] %v158
  %177 = vst [vmem:[#allocation2 + $0x70] sm:$0xff] %v120
  %178 = vst [vmem:[#allocation2 + $0x78] sm:$0xff] %v161
  %v179 = vld [vmem:[%s6 + $0x4] sm:$0x1]
  %v180 = vld [vmem:[#allocation2] sm:$0xff]
  %v181 = vld [vmem:[#allocation2 + $0x8] sm:$0xff]
  %v182 = vld [vmem:[%s4] sm:$0xff]
  %v183 = vld [vmem:[%s4 + $0x8] sm:$0xff]
  %v184 = vld [vmem:[%s4 + $0x10] sm:$0xff]
  %v185 = vld [vmem:[%s4 + $0x18] sm:$0xff]
  %v186 = vld [vmem:[%s4 + $0x20] sm:$0xff]
  %v187 = vld [vmem:[%s4 + $0x28] sm:$0xff]
  %v188 = vld [vmem:[%s4 + $0x30] sm:$0xff]
  %v189 = vld [vmem:[%s4 + $0x38] sm:$0xff]
  %v190 = vld [vmem:[%s4 + $0x40] sm:$0xff]
  %v191 = vld [vmem:[%s4 + $0x48] sm:$0xff]
  %v192 = vld [vmem:[%s4 + $0x50] sm:$0xff]
  %v193 = vld [vmem:[%s4 + $0x58] sm:$0xff]
  %v194 = vld [vmem:[%s4 + $0x60] sm:$0xff]
  %v195 = vld [vmem:[%s4 + $0x68] sm:$0xff]
  %v196 = vld [vmem:[%s4 + $0x70] sm:$0xff]
  %v197 = vld [vmem:[%s4 + $0x78] sm:$0xff]
  %v199 = vsel %vm56, 0.0, 0
  %201 = vmatpush.msra.mxu0 0.0
  %202 = vmatpush.msra.mxu0 0.0
  %203 = vmatpush.msra.mxu0 0.0
  %204 = vmatpush.msra.mxu0 0.0
  %205 = vmatpush.msra.mxu0 0.0
  %206 = vmatpush.msra.mxu0 0.0
  %207 = vmatpush.msra.mxu0 0.0
  %208 = vmatpush.msra.mxu0 0.0
  %209 = vmatpush.msra.mxu0 %v196
  %210 = vmatpush.msra.mxu0 %v194
  %211 = vmatpush.msra.mxu0 %v192
  %212 = vmatpush.msra.mxu0 %v190
  %213 = vmatpush.msra.mxu0 %v188
  %214 = vmatpush.msra.mxu0 %v186
  %215 = vmatpush.msra.mxu0 %v184
  %216 = vmatpush.msra.mxu0 %v182
  %217 = vmatmul.f32.gmra.mxu0 %v199
  %v218 = vpop.f32.mrf.mxu0
  %v219 = vadd.f32 0.0, %v218
  %220 = vdwg.mxu0
  %221 = vmatpush.msra.mxu0 0.0
  %222 = vmatpush.msra.mxu0 0.0
  %223 = vmatpush.msra.mxu0 0.0
  %224 = vmatpush.msra.mxu0 0.0
  %225 = vmatpush.msra.mxu0 0.0
  %226 = vmatpush.msra.mxu0 0.0
  %227 = vmatpush.msra.mxu0 0.0
  %228 = vmatpush.msra.mxu0 0.0
  %229 = vmatpush.msra.mxu0 %v197
  %230 = vmatpush.msra.mxu0 %v195
  %231 = vmatpush.msra.mxu0 %v193
  %232 = vmatpush.msra.mxu0 %v191
  %233 = vmatpush.msra.mxu0 %v189
  %234 = vmatpush.msra.mxu0 %v187
  %235 = vmatpush.msra.mxu0 %v185
  %236 = vmatpush.msra.mxu0 %v183
  %237 = vmatmul.f32.gmra.mxu0 %v199
  %v238 = vpop.f32.mrf.mxu0
  %v239 = vadd.f32 0.0, %v238
  %240 = vdwg.mxu0
  %v241 = vadd.f32 %v180, %v219
  %v242 = vxor.u32 %v241, 2147483648
  %v243 = vmul.f32 %v242, 1.442695
  %v244 = vpow.pop %v243
  %v245 = vadd.f32 %v244, 1.0
  %v246 = vrcp.pop %v245
  %v247 = vmul.f32 %v245, %v246
  %v248 = vsub.f32 1.0, %v247
  %v249 = vmul.f32 %v246, %v248
  %v250 = vadd.f32 %v246, %v249
  %vm251 = vweird.f32 %v245
  %vm252 = vweird.f32 %v246
  %vm253 = vmor %vm251, %vm252
  %v254 = vsel %vm253, %v246, %v250
  %v255 = vand.u32 2147483647, %v245
  %vm256 = vcmp.eq.f32.partialorder %v255, 8.507059e+37
  %v257 = vand.u32 %v245, 2147483648
  %v258 = vor.u32 1.1754944e-38, %v257
  %v259 = vsel %vm256, %v258, %v254
  %v260 = vmul.f32 1.0, %v259
  %261 = vrot.lane.b32.xlu0 %v260, 64
  %v262 = vpop.permute.xlu0 %261
  %v263 = vperm.slane %v179, 0
  %v264 = vadd.f32 %v239, %v263
  %v265 = vmul.f32 %v260, %v264
  %v266 = vadd.f32 %v181, %v265
  %v267 = vtanh.pop %v266
  %v268 = vsub.f32 1.0, %v262
  %v269 = vmul.f32 %v268, %v267
  %v270 = vmul.f32 %v262, 0.0
  %v271 = vadd.f32 %v269, %v270
  %272 = vst.msk [vmem:[#allocation3] sm:$0xff] %vm56, %v271
  %s273 = scalar_lea.vmem [#allocation2], 16
  %v274 = vld [vmem:[%s273] sm:$0xff]
  %v275 = vld [vmem:[%s273 + $0x8] sm:$0xff]
  %v276 = vld [vmem:[%s4] sm:$0xff]
  %v277 = vld [vmem:[%s4 + $0x8] sm:$0xff]
  %v278 = vld [vmem:[%s4 + $0x10] sm:$0xff]
  %v279 = vld [vmem:[%s4 + $0x18] sm:$0xff]
  %v280 = vld [vmem:[%s4 + $0x20] sm:$0xff]
  %v281 = vld [vmem:[%s4 + $0x28] sm:$0xff]
  %v282 = vld [vmem:[%s4 + $0x30] sm:$0xff]
  %v283 = vld [vmem:[%s4 + $0x38] sm:$0xff]
  %v284 = vld [vmem:[%s4 + $0x40] sm:$0xff]
  %v285 = vld [vmem:[%s4 + $0x48] sm:$0xff]
  %v286 = vld [vmem:[%s4 + $0x50] sm:$0xff]
  %v287 = vld [vmem:[%s4 + $0x58] sm:$0xff]
  %v288 = vld [vmem:[%s4 + $0x60] sm:$0xff]
  %v289 = vld [vmem:[%s4 + $0x68] sm:$0xff]
  %v290 = vld [vmem:[%s4 + $0x70] sm:$0xff]
  %v291 = vld [vmem:[%s4 + $0x78] sm:$0xff]
  %v293 = vsel %vm56, %v271, 0
  %295 = vmatpush.msra.mxu0 0.0
  %296 = vmatpush.msra.mxu0 0.0
  %297 = vmatpush.msra.mxu0 0.0
  %298 = vmatpush.msra.mxu0 0.0
  %299 = vmatpush.msra.mxu0 0.0
  %300 = vmatpush.msra.mxu0 0.0
  %301 = vmatpush.msra.mxu0 0.0
  %302 = vmatpush.msra.mxu0 0.0
  %303 = vmatpush.msra.mxu0 %v290
  %304 = vmatpush.msra.mxu0 %v288
  %305 = vmatpush.msra.mxu0 %v286
  %306 = vmatpush.msra.mxu0 %v284
  %307 = vmatpush.msra.mxu0 %v282
  %308 = vmatpush.msra.mxu0 %v280
  %309 = vmatpush.msra.mxu0 %v278
  %310 = vmatpush.msra.mxu0 %v276
  %311 = vmatmul.f32.gmra.mxu0 %v293
  %v312 = vpop.f32.mrf.mxu0
  %v313 = vadd.f32 0.0, %v312
  %314 = vdwg.mxu0
  %315 = vmatpush.msra.mxu0 0.0
  %316 = vmatpush.msra.mxu0 0.0
  %317 = vmatpush.msra.mxu0 0.0
  %318 = vmatpush.msra.mxu0 0.0
  %319 = vmatpush.msra.mxu0 0.0
  %320 = vmatpush.msra.mxu0 0.0
  %321 = vmatpush.msra.mxu0 0.0
  %322 = vmatpush.msra.mxu0 0.0
  %323 = vmatpush.msra.mxu0 %v291
  %324 = vmatpush.msra.mxu0 %v289
  %325 = vmatpush.msra.mxu0 %v287
  %326 = vmatpush.msra.mxu0 %v285
  %327 = vmatpush.msra.mxu0 %v283
  %328 = vmatpush.msra.mxu0 %v281
  %329 = vmatpush.msra.mxu0 %v279
  %330 = vmatpush.msra.mxu0 %v277
  %331 = vmatmul.f32.gmra.mxu0 %v293
  %v332 = vpop.f32.mrf.mxu0
  %v333 = vadd.f32 0.0, %v332
  %334 = vdwg.mxu0
  %v335 = vadd.f32 %v274, %v313
  %v336 = vxor.u32 %v335, 2147483648
  %v337 = vmul.f32 %v336, 1.442695
  %v338 = vpow.pop %v337
  %v339 = vadd.f32 %v338, 1.0
  %v340 = vrcp.pop %v339
  %v341 = vmul.f32 %v339, %v340
  %v342 = vsub.f32 1.0, %v341
  %v343 = vmul.f32 %v340, %v342
  %v344 = vadd.f32 %v340, %v343
  %vm345 = vweird.f32 %v339
  %vm346 = vweird.f32 %v340
  %vm347 = vmor %vm345, %vm346
  %v348 = vsel %vm347, %v340, %v344
  %v349 = vand.u32 2147483647, %v339
  %vm350 = vcmp.eq.f32.partialorder %v349, 8.507059e+37
  %v351 = vand.u32 %v339, 2147483648
  %v352 = vor.u32 1.1754944e-38, %v351
  %v353 = vsel %vm350, %v352, %v348
  %v354 = vmul.f32 1.0, %v353
  %355 = vrot.lane.b32.xlu0 %v354, 64
  %v356 = vpop.permute.xlu0 %355
  %v357 = vadd.f32 %v333, %v263
  %v358 = vmul.f32 %v354, %v357
  %v359 = vadd.f32 %v275, %v358
  %v360 = vtanh.pop %v359
  %v361 = vsub.f32 1.0, %v356
  %v362 = vmul.f32 %v361, %v360
  %v363 = vmul.f32 %v356, %v271
  %v364 = vadd.f32 %v362, %v363
  %s365 = scalar_lea.vmem [#allocation3], 8
  %366 = vst.msk [vmem:[%s365] sm:$0xff] %vm56, %v364
  %s367 = scalar_lea.vmem [#allocation2], 32
  %v368 = vld [vmem:[%s367] sm:$0xff]
  %v369 = vld [vmem:[%s367 + $0x8] sm:$0xff]
  %v370 = vld [vmem:[%s4] sm:$0xff]
  %v371 = vld [vmem:[%s4 + $0x8] sm:$0xff]
  %v372 = vld [vmem:[%s4 + $0x10] sm:$0xff]
  %v373 = vld [vmem:[%s4 + $0x18] sm:$0xff]
  %v374 = vld [vmem:[%s4 + $0x20] sm:$0xff]
  %v375 = vld [vmem:[%s4 + $0x28] sm:$0xff]
  %v376 = vld [vmem:[%s4 + $0x30] sm:$0xff]
  %v377 = vld [vmem:[%s4 + $0x38] sm:$0xff]
  %v378 = vld [vmem:[%s4 + $0x40] sm:$0xff]
  %v379 = vld [vmem:[%s4 + $0x48] sm:$0xff]
  %v380 = vld [vmem:[%s4 + $0x50] sm:$0xff]
  %v381 = vld [vmem:[%s4 + $0x58] sm:$0xff]
  %v382 = vld [vmem:[%s4 + $0x60] sm:$0xff]
  %v383 = vld [vmem:[%s4 + $0x68] sm:$0xff]
  %v384 = vld [vmem:[%s4 + $0x70] sm:$0xff]
  %v385 = vld [vmem:[%s4 + $0x78] sm:$0xff]
  %v387 = vsel %vm56, %v364, 0
  %389 = vmatpush.msra.mxu0 0.0
  %390 = vmatpush.msra.mxu0 0.0
  %391 = vmatpush.msra.mxu0 0.0
  %392 = vmatpush.msra.mxu0 0.0
  %393 = vmatpush.msra.mxu0 0.0
  %394 = vmatpush.msra.mxu0 0.0
  %395 = vmatpush.msra.mxu0 0.0
  %396 = vmatpush.msra.mxu0 0.0
  %397 = vmatpush.msra.mxu0 %v384
  %398 = vmatpush.msra.mxu0 %v382
  %399 = vmatpush.msra.mxu0 %v380
  %400 = vmatpush.msra.mxu0 %v378
  %401 = vmatpush.msra.mxu0 %v376
  %402 = vmatpush.msra.mxu0 %v374
  %403 = vmatpush.msra.mxu0 %v372
  %404 = vmatpush.msra.mxu0 %v370
  %405 = vmatmul.f32.gmra.mxu0 %v387
  %v406 = vpop.f32.mrf.mxu0
  %v407 = vadd.f32 0.0, %v406
  %408 = vdwg.mxu0
  %409 = vmatpush.msra.mxu0 0.0
  %410 = vmatpush.msra.mxu0 0.0
  %411 = vmatpush.msra.mxu0 0.0
  %412 = vmatpush.msra.mxu0 0.0
  %413 = vmatpush.msra.mxu0 0.0
  %414 = vmatpush.msra.mxu0 0.0
  %415 = vmatpush.msra.mxu0 0.0
  %416 = vmatpush.msra.mxu0 0.0
  %417 = vmatpush.msra.mxu0 %v385
  %418 = vmatpush.msra.mxu0 %v383
  %419 = vmatpush.msra.mxu0 %v381
  %420 = vmatpush.msra.mxu0 %v379
  %421 = vmatpush.msra.mxu0 %v377
  %422 = vmatpush.msra.mxu0 %v375
  %423 = vmatpush.msra.mxu0 %v373
  %424 = vmatpush.msra.mxu0 %v371
  %425 = vmatmul.f32.gmra.mxu0 %v387
  %v426 = vpop.f32.mrf.mxu0
  %v427 = vadd.f32 0.0, %v426
  %428 = vdwg.mxu0
  %v429 = vadd.f32 %v368, %v407
  %v430 = vxor.u32 %v429, 2147483648
  %v431 = vmul.f32 %v430, 1.442695
  %v432 = vpow.pop %v431
  %v433 = vadd.f32 %v432, 1.0
  %v434 = vrcp.pop %v433
  %v435 = vmul.f32 %v433, %v434
  %v436 = vsub.f32 1.0, %v435
  %v437 = vmul.f32 %v434, %v436
  %v438 = vadd.f32 %v434, %v437
  %vm439 = vweird.f32 %v433
  %vm440 = vweird.f32 %v434
  %vm441 = vmor %vm439, %vm440
  %v442 = vsel %vm441, %v434, %v438
  %v443 = vand.u32 2147483647, %v433
  %vm444 = vcmp.eq.f32.partialorder %v443, 8.507059e+37
  %v445 = vand.u32 %v433, 2147483648
  %v446 = vor.u32 1.1754944e-38, %v445
  %v447 = vsel %vm444, %v446, %v442
  %v448 = vmul.f32 1.0, %v447
  %449 = vrot.lane.b32.xlu0 %v448, 64
  %v450 = vpop.permute.xlu0 %449
  %v451 = vadd.f32 %v427, %v263
  %v452 = vmul.f32 %v448, %v451
  %v453 = vadd.f32 %v369, %v452
  %v454 = vtanh.pop %v453
  %v455 = vsub.f32 1.0, %v450
  %v456 = vmul.f32 %v455, %v454
  %v457 = vmul.f32 %v450, %v364
  %v458 = vadd.f32 %v456, %v457
  %s459 = scalar_lea.vmem [#allocation3], 16
  %460 = vst.msk [vmem:[%s459] sm:$0xff] %vm56, %v458
  %s461 = scalar_lea.vmem [#allocation2], 48
  %v462 = vld [vmem:[%s461] sm:$0xff]
  %v463 = vld [vmem:[%s461 + $0x8] sm:$0xff]
  %v464 = vld [vmem:[%s4] sm:$0xff]
  %v465 = vld [vmem:[%s4 + $0x8] sm:$0xff]
  %v466 = vld [vmem:[%s4 + $0x10] sm:$0xff]
  %v467 = vld [vmem:[%s4 + $0x18] sm:$0xff]
  %v468 = vld [vmem:[%s4 + $0x20] sm:$0xff]
  %v469 = vld [vmem:[%s4 + $0x28] sm:$0xff]
  %v470 = vld [vmem:[%s4 + $0x30] sm:$0xff]
  %v471 = vld [vmem:[%s4 + $0x38] sm:$0xff]
  %v472 = vld [vmem:[%s4 + $0x40] sm:$0xff]
  %v473 = vld [vmem:[%s4 + $0x48] sm:$0xff]
  %v474 = vld [vmem:[%s4 + $0x50] sm:$0xff]
  %v475 = vld [vmem:[%s4 + $0x58] sm:$0xff]
  %v476 = vld [vmem:[%s4 + $0x60] sm:$0xff]
  %v477 = vld [vmem:[%s4 + $0x68] sm:$0xff]
  %v478 = vld [vmem:[%s4 + $0x70] sm:$0xff]
  %v479 = vld [vmem:[%s4 + $0x78] sm:$0xff]
  %v481 = vsel %vm56, %v458, 0
  %483 = vmatpush.msra.mxu0 0.0
  %484 = vmatpush.msra.mxu0 0.0
  %485 = vmatpush.msra.mxu0 0.0
  %486 = vmatpush.msra.mxu0 0.0
  %487 = vmatpush.msra.mxu0 0.0
  %488 = vmatpush.msra.mxu0 0.0
  %489 = vmatpush.msra.mxu0 0.0
  %490 = vmatpush.msra.mxu0 0.0
  %491 = vmatpush.msra.mxu0 %v478
  %492 = vmatpush.msra.mxu0 %v476
  %493 = vmatpush.msra.mxu0 %v474
  %494 = vmatpush.msra.mxu0 %v472
  %495 = vmatpush.msra.mxu0 %v470
  %496 = vmatpush.msra.mxu0 %v468
  %497 = vmatpush.msra.mxu0 %v466
  %498 = vmatpush.msra.mxu0 %v464
  %499 = vmatmul.f32.gmra.mxu0 %v481
  %v500 = vpop.f32.mrf.mxu0
  %v501 = vadd.f32 0.0, %v500
  %502 = vdwg.mxu0
  %503 = vmatpush.msra.mxu0 0.0
  %504 = vmatpush.msra.mxu0 0.0
  %505 = vmatpush.msra.mxu0 0.0
  %506 = vmatpush.msra.mxu0 0.0
  %507 = vmatpush.msra.mxu0 0.0
  %508 = vmatpush.msra.mxu0 0.0
  %509 = vmatpush.msra.mxu0 0.0
  %510 = vmatpush.msra.mxu0 0.0
  %511 = vmatpush.msra.mxu0 %v479
  %512 = vmatpush.msra.mxu0 %v477
  %513 = vmatpush.msra.mxu0 %v475
  %514 = vmatpush.msra.mxu0 %v473
  %515 = vmatpush.msra.mxu0 %v471
  %516 = vmatpush.msra.mxu0 %v469
  %517 = vmatpush.msra.mxu0 %v467
  %518 = vmatpush.msra.mxu0 %v465
  %519 = vmatmul.f32.gmra.mxu0 %v481
  %v520 = vpop.f32.mrf.mxu0
  %v521 = vadd.f32 0.0, %v520
  %522 = vdwg.mxu0
  %v523 = vadd.f32 %v462, %v501
  %v524 = vxor.u32 %v523, 2147483648
  %v525 = vmul.f32 %v524, 1.442695
  %v526 = vpow.pop %v525
  %v527 = vadd.f32 %v526, 1.0
  %v528 = vrcp.pop %v527
  %v529 = vmul.f32 %v527, %v528
  %v530 = vsub.f32 1.0, %v529
  %v531 = vmul.f32 %v528, %v530
  %v532 = vadd.f32 %v528, %v531
  %vm533 = vweird.f32 %v527
  %vm534 = vweird.f32 %v528
  %vm535 = vmor %vm533, %vm534
  %v536 = vsel %vm535, %v528, %v532
  %v537 = vand.u32 2147483647, %v527
  %vm538 = vcmp.eq.f32.partialorder %v537, 8.507059e+37
  %v539 = vand.u32 %v527, 2147483648
  %v540 = vor.u32 1.1754944e-38, %v539
  %v541 = vsel %vm538, %v540, %v536
  %v542 = vmul.f32 1.0, %v541
  %543 = vrot.lane.b32.xlu0 %v542, 64
  %v544 = vpop.permute.xlu0 %543
  %v545 = vadd.f32 %v521, %v263
  %v546 = vmul.f32 %v542, %v545
  %v547 = vadd.f32 %v463, %v546
  %v548 = vtanh.pop %v547
  %v549 = vsub.f32 1.0, %v544
  %v550 = vmul.f32 %v549, %v548
  %v551 = vmul.f32 %v544, %v458
  %v552 = vadd.f32 %v550, %v551
  %s553 = scalar_lea.vmem [#allocation3], 24
  %554 = vst.msk [vmem:[%s553] sm:$0xff] %vm56, %v552
  %s555 = scalar_lea.vmem [#allocation2], 64
  %v556 = vld [vmem:[%s555] sm:$0xff]
  %v557 = vld [vmem:[%s555 + $0x8] sm:$0xff]
  %v558 = vld [vmem:[%s4] sm:$0xff]
  %v559 = vld [vmem:[%s4 + $0x8] sm:$0xff]
  %v560 = vld [vmem:[%s4 + $0x10] sm:$0xff]
  %v561 = vld [vmem:[%s4 + $0x18] sm:$0xff]
  %v562 = vld [vmem:[%s4 + $0x20] sm:$0xff]
  %v563 = vld [vmem:[%s4 + $0x28] sm:$0xff]
  %v564 = vld [vmem:[%s4 + $0x30] sm:$0xff]
  %v565 = vld [vmem:[%s4 + $0x38] sm:$0xff]
  %v566 = vld [vmem:[%s4 + $0x40] sm:$0xff]
  %v567 = vld [vmem:[%s4 + $0x48] sm:$0xff]
  %v568 = vld [vmem:[%s4 + $0x50] sm:$0xff]
  %v569 = vld [vmem:[%s4 + $0x58] sm:$0xff]
  %v570 = vld [vmem:[%s4 + $0x60] sm:$0xff]
  %v571 = vld [vmem:[%s4 + $0x68] sm:$0xff]
  %v572 = vld [vmem:[%s4 + $0x70] sm:$0xff]
  %v573 = vld [vmem:[%s4 + $0x78] sm:$0xff]
  %v575 = vsel %vm56, %v552, 0
  %577 = vmatpush.msra.mxu0 0.0
  %578 = vmatpush.msra.mxu0 0.0
  %579 = vmatpush.msra.mxu0 0.0
  %580 = vmatpush.msra.mxu0 0.0
  %581 = vmatpush.msra.mxu0 0.0
  %582 = vmatpush.msra.mxu0 0.0
  %583 = vmatpush.msra.mxu0 0.0
  %584 = vmatpush.msra.mxu0 0.0
  %585 = vmatpush.msra.mxu0 %v572
  %586 = vmatpush.msra.mxu0 %v570
  %587 = vmatpush.msra.mxu0 %v568
  %588 = vmatpush.msra.mxu0 %v566
  %589 = vmatpush.msra.mxu0 %v564
  %590 = vmatpush.msra.mxu0 %v562
  %591 = vmatpush.msra.mxu0 %v560
  %592 = vmatpush.msra.mxu0 %v558
  %593 = vmatmul.f32.gmra.mxu0 %v575
  %v594 = vpop.f32.mrf.mxu0
  %v595 = vadd.f32 0.0, %v594
  %596 = vdwg.mxu0
  %597 = vmatpush.msra.mxu0 0.0
  %598 = vmatpush.msra.mxu0 0.0
  %599 = vmatpush.msra.mxu0 0.0
  %600 = vmatpush.msra.mxu0 0.0
  %601 = vmatpush.msra.mxu0 0.0
  %602 = vmatpush.msra.mxu0 0.0
  %603 = vmatpush.msra.mxu0 0.0
  %604 = vmatpush.msra.mxu0 0.0
  %605 = vmatpush.msra.mxu0 %v573
  %606 = vmatpush.msra.mxu0 %v571
  %607 = vmatpush.msra.mxu0 %v569
  %608 = vmatpush.msra.mxu0 %v567
  %609 = vmatpush.msra.mxu0 %v565
  %610 = vmatpush.msra.mxu0 %v563
  %611 = vmatpush.msra.mxu0 %v561
  %612 = vmatpush.msra.mxu0 %v559
  %613 = vmatmul.f32.gmra.mxu0 %v575
  %v614 = vpop.f32.mrf.mxu0
  %v615 = vadd.f32 0.0, %v614
  %616 = vdwg.mxu0
  %v617 = vadd.f32 %v556, %v595
  %v618 = vxor.u32 %v617, 2147483648
  %v619 = vmul.f32 %v618, 1.442695
  %v620 = vpow.pop %v619
  %v621 = vadd.f32 %v620, 1.0
  %v622 = vrcp.pop %v621
  %v623 = vmul.f32 %v621, %v622
  %v624 = vsub.f32 1.0, %v623
  %v625 = vmul.f32 %v622, %v624
  %v626 = vadd.f32 %v622, %v625
  %vm627 = vweird.f32 %v621
  %vm628 = vweird.f32 %v622
  %vm629 = vmor %vm627, %vm628
  %v630 = vsel %vm629, %v622, %v626
  %v631 = vand.u32 2147483647, %v621
  %vm632 = vcmp.eq.f32.partialorder %v631, 8.507059e+37
  %v633 = vand.u32 %v621, 2147483648
  %v634 = vor.u32 1.1754944e-38, %v633
  %v635 = vsel %vm632, %v634, %v630
  %v636 = vmul.f32 1.0, %v635
  %637 = vrot.lane.b32.xlu0 %v636, 64
  %v638 = vpop.permute.xlu0 %637
  %v639 = vadd.f32 %v615, %v263
  %v640 = vmul.f32 %v636, %v639
  %v641 = vadd.f32 %v557, %v640
  %v642 = vtanh.pop %v641
  %v643 = vsub.f32 1.0, %v638
  %v644 = vmul.f32 %v643, %v642
  %v645 = vmul.f32 %v638, %v552
  %v646 = vadd.f32 %v644, %v645
  %s647 = scalar_lea.vmem [#allocation3], 32
  %648 = vst.msk [vmem:[%s647] sm:$0xff] %vm56, %v646
  %s649 = scalar_lea.vmem [#allocation2], 80
  %v650 = vld [vmem:[%s649] sm:$0xff]
  %v651 = vld [vmem:[%s649 + $0x8] sm:$0xff]
  %v652 = vld [vmem:[%s4] sm:$0xff]
  %v653 = vld [vmem:[%s4 + $0x8] sm:$0xff]
  %v654 = vld [vmem:[%s4 + $0x10] sm:$0xff]
  %v655 = vld [vmem:[%s4 + $0x18] sm:$0xff]
  %v656 = vld [vmem:[%s4 + $0x20] sm:$0xff]
  %v657 = vld [vmem:[%s4 + $0x28] sm:$0xff]
  %v658 = vld [vmem:[%s4 + $0x30] sm:$0xff]
  %v659 = vld [vmem:[%s4 + $0x38] sm:$0xff]
  %v660 = vld [vmem:[%s4 + $0x40] sm:$0xff]
  %v661 = vld [vmem:[%s4 + $0x48] sm:$0xff]
  %v662 = vld [vmem:[%s4 + $0x50] sm:$0xff]
  %v663 = vld [vmem:[%s4 + $0x58] sm:$0xff]
  %v664 = vld [vmem:[%s4 + $0x60] sm:$0xff]
  %v665 = vld [vmem:[%s4 + $0x68] sm:$0xff]
  %v666 = vld [vmem:[%s4 + $0x70] sm:$0xff]
  %v667 = vld [vmem:[%s4 + $0x78] sm:$0xff]
  %v669 = vsel %vm56, %v646, 0
  %671 = vmatpush.msra.mxu0 0.0
  %672 = vmatpush.msra.mxu0 0.0
  %673 = vmatpush.msra.mxu0 0.0
  %674 = vmatpush.msra.mxu0 0.0
  %675 = vmatpush.msra.mxu0 0.0
  %676 = vmatpush.msra.mxu0 0.0
  %677 = vmatpush.msra.mxu0 0.0
  %678 = vmatpush.msra.mxu0 0.0
  %679 = vmatpush.msra.mxu0 %v666
  %680 = vmatpush.msra.mxu0 %v664
  %681 = vmatpush.msra.mxu0 %v662
  %682 = vmatpush.msra.mxu0 %v660
  %683 = vmatpush.msra.mxu0 %v658
  %684 = vmatpush.msra.mxu0 %v656
  %685 = vmatpush.msra.mxu0 %v654
  %686 = vmatpush.msra.mxu0 %v652
  %687 = vmatmul.f32.gmra.mxu0 %v669
  %v688 = vpop.f32.mrf.mxu0
  %v689 = vadd.f32 0.0, %v688
  %690 = vdwg.mxu0
  %691 = vmatpush.msra.mxu0 0.0
  %692 = vmatpush.msra.mxu0 0.0
  %693 = vmatpush.msra.mxu0 0.0
  %694 = vmatpush.msra.mxu0 0.0
  %695 = vmatpush.msra.mxu0 0.0
  %696 = vmatpush.msra.mxu0 0.0
  %697 = vmatpush.msra.mxu0 0.0
  %698 = vmatpush.msra.mxu0 0.0
  %699 = vmatpush.msra.mxu0 %v667
  %700 = vmatpush.msra.mxu0 %v665
  %701 = vmatpush.msra.mxu0 %v663
  %702 = vmatpush.msra.mxu0 %v661
  %703 = vmatpush.msra.mxu0 %v659
  %704 = vmatpush.msra.mxu0 %v657
  %705 = vmatpush.msra.mxu0 %v655
  %706 = vmatpush.msra.mxu0 %v653
  %707 = vmatmul.f32.gmra.mxu0 %v669
  %v708 = vpop.f32.mrf.mxu0
  %v709 = vadd.f32 0.0, %v708
  %710 = vdwg.mxu0
  %v711 = vadd.f32 %v650, %v689
  %v712 = vxor.u32 %v711, 2147483648
  %v713 = vmul.f32 %v712, 1.442695
  %v714 = vpow.pop %v713
  %v715 = vadd.f32 %v714, 1.0
  %v716 = vrcp.pop %v715
  %v717 = vmul.f32 %v715, %v716
  %v718 = vsub.f32 1.0, %v717
  %v719 = vmul.f32 %v716, %v718
  %v720 = vadd.f32 %v716, %v719
  %vm721 = vweird.f32 %v715
  %vm722 = vweird.f32 %v716
  %vm723 = vmor %vm721, %vm722
  %v724 = vsel %vm723, %v716, %v720
  %v725 = vand.u32 2147483647, %v715
  %vm726 = vcmp.eq.f32.partialorder %v725, 8.507059e+37
  %v727 = vand.u32 %v715, 2147483648
  %v728 = vor.u32 1.1754944e-38, %v727
  %v729 = vsel %vm726, %v728, %v724
  %v730 = vmul.f32 1.0, %v729
  %731 = vrot.lane.b32.xlu0 %v730, 64
  %v732 = vpop.permute.xlu0 %731
  %v733 = vadd.f32 %v709, %v263
  %v734 = vmul.f32 %v730, %v733
  %v735 = vadd.f32 %v651, %v734
  %v736 = vtanh.pop %v735
  %v737 = vsub.f32 1.0, %v732
  %v738 = vmul.f32 %v737, %v736
  %v739 = vmul.f32 %v732, %v646
  %v740 = vadd.f32 %v738, %v739
  %s741 = scalar_lea.vmem [#allocation3], 40
  %742 = vst.msk [vmem:[%s741] sm:$0xff] %vm56, %v740
  %s743 = scalar_lea.vmem [#allocation2], 96
  %v744 = vld [vmem:[%s743] sm:$0xff]
  %v745 = vld [vmem:[%s743 + $0x8] sm:$0xff]
  %v746 = vld [vmem:[%s4] sm:$0xff]
  %v747 = vld [vmem:[%s4 + $0x8] sm:$0xff]
  %v748 = vld [vmem:[%s4 + $0x10] sm:$0xff]
  %v749 = vld [vmem:[%s4 + $0x18] sm:$0xff]
  %v750 = vld [vmem:[%s4 + $0x20] sm:$0xff]
  %v751 = vld [vmem:[%s4 + $0x28] sm:$0xff]
  %v752 = vld [vmem:[%s4 + $0x30] sm:$0xff]
  %v753 = vld [vmem:[%s4 + $0x38] sm:$0xff]
  %v754 = vld [vmem:[%s4 + $0x40] sm:$0xff]
  %v755 = vld [vmem:[%s4 + $0x48] sm:$0xff]
  %v756 = vld [vmem:[%s4 + $0x50] sm:$0xff]
  %v757 = vld [vmem:[%s4 + $0x58] sm:$0xff]
  %v758 = vld [vmem:[%s4 + $0x60] sm:$0xff]
  %v759 = vld [vmem:[%s4 + $0x68] sm:$0xff]
  %v760 = vld [vmem:[%s4 + $0x70] sm:$0xff]
  %v761 = vld [vmem:[%s4 + $0x78] sm:$0xff]
  %v763 = vsel %vm56, %v740, 0
  %765 = vmatpush.msra.mxu0 0.0
  %766 = vmatpush.msra.mxu0 0.0
  %767 = vmatpush.msra.mxu0 0.0
  %768 = vmatpush.msra.mxu0 0.0
  %769 = vmatpush.msra.mxu0 0.0
  %770 = vmatpush.msra.mxu0 0.0
  %771 = vmatpush.msra.mxu0 0.0
  %772 = vmatpush.msra.mxu0 0.0
  %773 = vmatpush.msra.mxu0 %v760
  %774 = vmatpush.msra.mxu0 %v758
  %775 = vmatpush.msra.mxu0 %v756
  %776 = vmatpush.msra.mxu0 %v754
  %777 = vmatpush.msra.mxu0 %v752
  %778 = vmatpush.msra.mxu0 %v750
  %779 = vmatpush.msra.mxu0 %v748
  %780 = vmatpush.msra.mxu0 %v746
  %781 = vmatmul.f32.gmra.mxu0 %v763
  %v782 = vpop.f32.mrf.mxu0
  %v783 = vadd.f32 0.0, %v782
  %784 = vdwg.mxu0
  %785 = vmatpush.msra.mxu0 0.0
  %786 = vmatpush.msra.mxu0 0.0
  %787 = vmatpush.msra.mxu0 0.0
  %788 = vmatpush.msra.mxu0 0.0
  %789 = vmatpush.msra.mxu0 0.0
  %790 = vmatpush.msra.mxu0 0.0
  %791 = vmatpush.msra.mxu0 0.0
  %792 = vmatpush.msra.mxu0 0.0
  %793 = vmatpush.msra.mxu0 %v761
  %794 = vmatpush.msra.mxu0 %v759
  %795 = vmatpush.msra.mxu0 %v757
  %796 = vmatpush.msra.mxu0 %v755
  %797 = vmatpush.msra.mxu0 %v753
  %798 = vmatpush.msra.mxu0 %v751
  %799 = vmatpush.msra.mxu0 %v749
  %800 = vmatpush.msra.mxu0 %v747
  %801 = vmatmul.f32.gmra.mxu0 %v763
  %v802 = vpop.f32.mrf.mxu0
  %v803 = vadd.f32 0.0, %v802
  %804 = vdwg.mxu0
  %v805 = vadd.f32 %v744, %v783
  %v806 = vxor.u32 %v805, 2147483648
  %v807 = vmul.f32 %v806, 1.442695
  %v808 = vpow.pop %v807
  %v809 = vadd.f32 %v808, 1.0
  %v810 = vrcp.pop %v809
  %v811 = vmul.f32 %v809, %v810
  %v812 = vsub.f32 1.0, %v811
  %v813 = vmul.f32 %v810, %v812
  %v814 = vadd.f32 %v810, %v813
  %vm815 = vweird.f32 %v809
  %vm816 = vweird.f32 %v810
  %vm817 = vmor %vm815, %vm816
  %v818 = vsel %vm817, %v810, %v814
  %v819 = vand.u32 2147483647, %v809
  %vm820 = vcmp.eq.f32.partialorder %v819, 8.507059e+37
  %v821 = vand.u32 %v809, 2147483648
  %v822 = vor.u32 1.1754944e-38, %v821
  %v823 = vsel %vm820, %v822, %v818
  %v824 = vmul.f32 1.0, %v823
  %825 = vrot.lane.b32.xlu0 %v824, 64
  %v826 = vpop.permute.xlu0 %825
  %v827 = vadd.f32 %v803, %v263
  %v828 = vmul.f32 %v824, %v827
  %v829 = vadd.f32 %v745, %v828
  %v830 = vtanh.pop %v829
  %v831 = vsub.f32 1.0, %v826
  %v832 = vmul.f32 %v831, %v830
  %v833 = vmul.f32 %v826, %v740
  %v834 = vadd.f32 %v832, %v833
  %s835 = scalar_lea.vmem [#allocation3], 48
  %836 = vst.msk [vmem:[%s835] sm:$0xff] %vm56, %v834
  %s837 = scalar_lea.vmem [#allocation2], 112
  %v838 = vld [vmem:[%s837] sm:$0xff]
  %v839 = vld [vmem:[%s837 + $0x8] sm:$0xff]
  %v840 = vld [vmem:[%s4] sm:$0xff]
  %v841 = vld [vmem:[%s4 + $0x8] sm:$0xff]
  %v842 = vld [vmem:[%s4 + $0x10] sm:$0xff]
  %v843 = vld [vmem:[%s4 + $0x18] sm:$0xff]
  %v844 = vld [vmem:[%s4 + $0x20] sm:$0xff]
  %v845 = vld [vmem:[%s4 + $0x28] sm:$0xff]
  %v846 = vld [vmem:[%s4 + $0x30] sm:$0xff]
  %v847 = vld [vmem:[%s4 + $0x38] sm:$0xff]
  %v848 = vld [vmem:[%s4 + $0x40] sm:$0xff]
  %v849 = vld [vmem:[%s4 + $0x48] sm:$0xff]
  %v850 = vld [vmem:[%s4 + $0x50] sm:$0xff]
  %v851 = vld [vmem:[%s4 + $0x58] sm:$0xff]
  %v852 = vld [vmem:[%s4 + $0x60] sm:$0xff]
  %v853 = vld [vmem:[%s4 + $0x68] sm:$0xff]
  %v854 = vld [vmem:[%s4 + $0x70] sm:$0xff]
  %v855 = vld [vmem:[%s4 + $0x78] sm:$0xff]
  %v857 = vsel %vm56, %v834, 0
  %859 = vmatpush.msra.mxu0 0.0
  %860 = vmatpush.msra.mxu0 0.0
  %861 = vmatpush.msra.mxu0 0.0
  %862 = vmatpush.msra.mxu0 0.0
  %863 = vmatpush.msra.mxu0 0.0
  %864 = vmatpush.msra.mxu0 0.0
  %865 = vmatpush.msra.mxu0 0.0
  %866 = vmatpush.msra.mxu0 0.0
  %867 = vmatpush.msra.mxu0 %v854
  %868 = vmatpush.msra.mxu0 %v852
  %869 = vmatpush.msra.mxu0 %v850
  %870 = vmatpush.msra.mxu0 %v848
  %871 = vmatpush.msra.mxu0 %v846
  %872 = vmatpush.msra.mxu0 %v844
  %873 = vmatpush.msra.mxu0 %v842
  %874 = vmatpush.msra.mxu0 %v840
  %875 = vmatmul.f32.gmra.mxu0 %v857
  %v876 = vpop.f32.mrf.mxu0
  %v877 = vadd.f32 0.0, %v876
  %878 = vdwg.mxu0
  %879 = vmatpush.msra.mxu0 0.0
  %880 = vmatpush.msra.mxu0 0.0
  %881 = vmatpush.msra.mxu0 0.0
  %882 = vmatpush.msra.mxu0 0.0
  %883 = vmatpush.msra.mxu0 0.0
  %884 = vmatpush.msra.mxu0 0.0
  %885 = vmatpush.msra.mxu0 0.0
  %886 = vmatpush.msra.mxu0 0.0
  %887 = vmatpush.msra.mxu0 %v855
  %888 = vmatpush.msra.mxu0 %v853
  %889 = vmatpush.msra.mxu0 %v851
  %890 = vmatpush.msra.mxu0 %v849
  %891 = vmatpush.msra.mxu0 %v847
  %892 = vmatpush.msra.mxu0 %v845
  %893 = vmatpush.msra.mxu0 %v843
  %894 = vmatpush.msra.mxu0 %v841
  %895 = vmatmul.f32.gmra.mxu0 %v857
  %v896 = vpop.f32.mrf.mxu0
  %v897 = vadd.f32 0.0, %v896
  %898 = vdwg.mxu0
  %v899 = vadd.f32 %v838, %v877
  %v900 = vxor.u32 %v899, 2147483648
  %v901 = vmul.f32 %v900, 1.442695
  %v902 = vpow.pop %v901
  %v903 = vadd.f32 %v902, 1.0
  %v904 = vrcp.pop %v903
  %v905 = vmul.f32 %v903, %v904
  %v906 = vsub.f32 1.0, %v905
  %v907 = vmul.f32 %v904, %v906
  %v908 = vadd.f32 %v904, %v907
  %vm909 = vweird.f32 %v903
  %vm910 = vweird.f32 %v904
  %vm911 = vmor %vm909, %vm910
  %v912 = vsel %vm911, %v904, %v908
  %v913 = vand.u32 2147483647, %v903
  %vm914 = vcmp.eq.f32.partialorder %v913, 8.507059e+37
  %v915 = vand.u32 %v903, 2147483648
  %v916 = vor.u32 1.1754944e-38, %v915
  %v917 = vsel %vm914, %v916, %v912
  %v918 = vmul.f32 1.0, %v917
  %919 = vrot.lane.b32.xlu0 %v918, 64
  %v920 = vpop.permute.xlu0 %919
  %v921 = vadd.f32 %v897, %v263
  %v922 = vmul.f32 %v918, %v921
  %v923 = vadd.f32 %v839, %v922
  %v924 = vtanh.pop %v923
  %v925 = vsub.f32 1.0, %v920
  %v926 = vmul.f32 %v925, %v924
  %v927 = vmul.f32 %v920, %v834
  %v928 = vadd.f32 %v926, %v927
  %s929 = scalar_lea.vmem [#allocation3], 56
  %930 = vst.msk [vmem:[%s929] sm:$0xff] %vm56, %v928
  %v931 = vld [vmem:[#allocation3] sm:$0xff]
  %v932 = vld [vmem:[%s5] sm:$0xff]
  %v933 = vld [vmem:[%s5 + $0x8] sm:$0xff]
  %v934 = vld [vmem:[%s5 + $0x10] sm:$0xff]
  %v935 = vld [vmem:[%s5 + $0x18] sm:$0xff]
  %v936 = vld [vmem:[%s5 + $0x20] sm:$0xff]
  %v937 = vld [vmem:[%s5 + $0x28] sm:$0xff]
  %v938 = vld [vmem:[%s5 + $0x30] sm:$0xff]
  %v939 = vld [vmem:[%s5 + $0x38] sm:$0xff]
  %v940 = vld [vmem:[%s365] sm:$0xff]
  %s941 = scalar_lea.vmem %s5, 64
  %v942 = vld [vmem:[%s941] sm:$0xff]
  %v943 = vld [vmem:[%s941 + $0x8] sm:$0xff]
  %v944 = vld [vmem:[%s941 + $0x10] sm:$0xff]
  %v945 = vld [vmem:[%s941 + $0x18] sm:$0xff]
  %v946 = vld [vmem:[%s941 + $0x20] sm:$0xff]
  %v947 = vld [vmem:[%s941 + $0x28] sm:$0xff]
  %v948 = vld [vmem:[%s941 + $0x30] sm:$0xff]
  %v949 = vld [vmem:[%s941 + $0x38] sm:$0xff]
  %v951 = vsel %vm56, %v940, 0
  %953 = vmatpush.msra.mxu0 0.0
  %954 = vmatpush.msra.mxu0 0.0
  %955 = vmatpush.msra.mxu0 0.0
  %956 = vmatpush.msra.mxu0 0.0
  %957 = vmatpush.msra.mxu0 0.0
  %958 = vmatpush.msra.mxu0 0.0
  %959 = vmatpush.msra.mxu0 0.0
  %960 = vmatpush.msra.mxu0 0.0
  %961 = vmatpush.msra.mxu0 %v949
  %962 = vmatpush.msra.mxu0 %v948
  %963 = vmatpush.msra.mxu0 %v947
  %964 = vmatpush.msra.mxu0 %v946
  %965 = vmatpush.msra.mxu0 %v945
  %966 = vmatpush.msra.mxu0 %v944
  %967 = vmatpush.msra.mxu0 %v943
  %968 = vmatpush.msra.mxu0 %v942
  %969 = vmatmul.f32.gmra.mxu0 %v951
  %v970 = vpop.f32.mrf.mxu0
  %v971 = vadd.f32 0.0, %v970
  %972 = vdwg.mxu0
  %v974 = vsel %vm56, %v931, 0
  %976 = vmatpush.msra.mxu0 0.0
  %977 = vmatpush.msra.mxu0 0.0
  %978 = vmatpush.msra.mxu0 0.0
  %979 = vmatpush.msra.mxu0 0.0
  %980 = vmatpush.msra.mxu0 0.0
  %981 = vmatpush.msra.mxu0 0.0
  %982 = vmatpush.msra.mxu0 0.0
  %983 = vmatpush.msra.mxu0 0.0
  %984 = vmatpush.msra.mxu0 %v939
  %985 = vmatpush.msra.mxu0 %v938
  %986 = vmatpush.msra.mxu0 %v937
  %987 = vmatpush.msra.mxu0 %v936
  %988 = vmatpush.msra.mxu0 %v935
  %989 = vmatpush.msra.mxu0 %v934
  %990 = vmatpush.msra.mxu0 %v933
  %991 = vmatpush.msra.mxu0 %v932
  %992 = vmatmul.f32.gmra.mxu0 %v974
  %v993 = vpop.f32.mrf.mxu0
  %v994 = vadd.f32 %v971, %v993
  %995 = vdwg.mxu0
  %v996 = vmax.f32 %v931, %v940
  %v997 = vld [vmem:[%s459] sm:$0xff]
  %s998 = scalar_lea.vmem %s5, 128
  %v999 = vld [vmem:[%s998] sm:$0xff]
  %v1000 = vld [vmem:[%s998 + $0x8] sm:$0xff]
  %v1001 = vld [vmem:[%s998 + $0x10] sm:$0xff]
  %v1002 = vld [vmem:[%s998 + $0x18] sm:$0xff]
  %v1003 = vld [vmem:[%s998 + $0x20] sm:$0xff]
  %v1004 = vld [vmem:[%s998 + $0x28] sm:$0xff]
  %v1005 = vld [vmem:[%s998 + $0x30] sm:$0xff]
  %v1006 = vld [vmem:[%s998 + $0x38] sm:$0xff]
  %v1008 = vsel %vm56, %v997, 0
  %1010 = vmatpush.msra.mxu0 0.0
  %1011 = vmatpush.msra.mxu0 0.0
  %1012 = vmatpush.msra.mxu0 0.0
  %1013 = vmatpush.msra.mxu0 0.0
  %1014 = vmatpush.msra.mxu0 0.0
  %1015 = vmatpush.msra.mxu0 0.0
  %1016 = vmatpush.msra.mxu0 0.0
  %1017 = vmatpush.msra.mxu0 0.0
  %1018 = vmatpush.msra.mxu0 %v1006
  %1019 = vmatpush.msra.mxu0 %v1005
  %1020 = vmatpush.msra.mxu0 %v1004
  %1021 = vmatpush.msra.mxu0 %v1003
  %1022 = vmatpush.msra.mxu0 %v1002
  %1023 = vmatpush.msra.mxu0 %v1001
  %1024 = vmatpush.msra.mxu0 %v1000
  %1025 = vmatpush.msra.mxu0 %v999
  %1026 = vmatmul.f32.gmra.mxu0 %v1008
  %v1027 = vpop.f32.mrf.mxu0
  %v1028 = vadd.f32 0.0, %v1027
  %1029 = vdwg.mxu0
  %v1030 = vadd.f32 %v994, %v1028
  %v1031 = vmax.f32 %v996, %v997
  %v1032 = vld [vmem:[%s553] sm:$0xff]
  %s1033 = scalar_lea.vmem %s5, 192
  %v1034 = vld [vmem:[%s1033] sm:$0xff]
  %v1035 = vld [vmem:[%s1033 + $0x8] sm:$0xff]
  %v1036 = vld [vmem:[%s1033 + $0x10] sm:$0xff]
  %v1037 = vld [vmem:[%s1033 + $0x18] sm:$0xff]
  %v1038 = vld [vmem:[%s1033 + $0x20] sm:$0xff]
  %v1039 = vld [vmem:[%s1033 + $0x28] sm:$0xff]
  %v1040 = vld [vmem:[%s1033 + $0x30] sm:$0xff]
  %v1041 = vld [vmem:[%s1033 + $0x38] sm:$0xff]
  %v1043 = vsel %vm56, %v1032, 0
  %1045 = vmatpush.msra.mxu0 0.0
  %1046 = vmatpush.msra.mxu0 0.0
  %1047 = vmatpush.msra.mxu0 0.0
  %1048 = vmatpush.msra.mxu0 0.0
  %1049 = vmatpush.msra.mxu0 0.0
  %1050 = vmatpush.msra.mxu0 0.0
  %1051 = vmatpush.msra.mxu0 0.0
  %1052 = vmatpush.msra.mxu0 0.0
  %1053 = vmatpush.msra.mxu0 %v1041
  %1054 = vmatpush.msra.mxu0 %v1040
  %1055 = vmatpush.msra.mxu0 %v1039
  %1056 = vmatpush.msra.mxu0 %v1038
  %1057 = vmatpush.msra.mxu0 %v1037
  %1058 = vmatpush.msra.mxu0 %v1036
  %1059 = vmatpush.msra.mxu0 %v1035
  %1060 = vmatpush.msra.mxu0 %v1034
  %1061 = vmatmul.f32.gmra.mxu0 %v1043
  %v1062 = vpop.f32.mrf.mxu0
  %v1063 = vadd.f32 0.0, %v1062
  %1064 = vdwg.mxu0
  %v1065 = vadd.f32 %v1030, %v1063
  %v1066 = vmax.f32 %v1031, %v1032
  %v1067 = vld [vmem:[%s647] sm:$0xff]
  %s1068 = scalar_lea.vmem %s5, 256
  %v1069 = vld [vmem:[%s1068] sm:$0xff]
  %v1070 = vld [vmem:[%s1068 + $0x8] sm:$0xff]
  %v1071 = vld [vmem:[%s1068 + $0x10] sm:$0xff]
  %v1072 = vld [vmem:[%s1068 + $0x18] sm:$0xff]
  %v1073 = vld [vmem:[%s1068 + $0x20] sm:$0xff]
  %v1074 = vld [vmem:[%s1068 + $0x28] sm:$0xff]
  %v1075 = vld [vmem:[%s1068 + $0x30] sm:$0xff]
  %v1076 = vld [vmem:[%s1068 + $0x38] sm:$0xff]
  %v1078 = vsel %vm56, %v1067, 0
  %1080 = vmatpush.msra.mxu0 0.0
  %1081 = vmatpush.msra.mxu0 0.0
  %1082 = vmatpush.msra.mxu0 0.0
  %1083 = vmatpush.msra.mxu0 0.0
  %1084 = vmatpush.msra.mxu0 0.0
  %1085 = vmatpush.msra.mxu0 0.0
  %1086 = vmatpush.msra.mxu0 0.0
  %1087 = vmatpush.msra.mxu0 0.0
  %1088 = vmatpush.msra.mxu0 %v1076
  %1089 = vmatpush.msra.mxu0 %v1075
  %1090 = vmatpush.msra.mxu0 %v1074
  %1091 = vmatpush.msra.mxu0 %v1073
  %1092 = vmatpush.msra.mxu0 %v1072
  %1093 = vmatpush.msra.mxu0 %v1071
  %1094 = vmatpush.msra.mxu0 %v1070
  %1095 = vmatpush.msra.mxu0 %v1069
  %1096 = vmatmul.f32.gmra.mxu0 %v1078
  %v1097 = vpop.f32.mrf.mxu0
  %v1098 = vadd.f32 0.0, %v1097
  %1099 = vdwg.mxu0
  %v1100 = vadd.f32 %v1065, %v1098
  %v1101 = vmax.f32 %v1066, %v1067
  %v1102 = vld [vmem:[%s741] sm:$0xff]
  %s1103 = scalar_lea.vmem %s5, 320
  %v1104 = vld [vmem:[%s1103] sm:$0xff]
  %v1105 = vld [vmem:[%s1103 + $0x8] sm:$0xff]
  %v1106 = vld [vmem:[%s1103 + $0x10] sm:$0xff]
  %v1107 = vld [vmem:[%s1103 + $0x18] sm:$0xff]
  %v1108 = vld [vmem:[%s1103 + $0x20] sm:$0xff]
  %v1109 = vld [vmem:[%s1103 + $0x28] sm:$0xff]
  %v1110 = vld [vmem:[%s1103 + $0x30] sm:$0xff]
  %v1111 = vld [vmem:[%s1103 + $0x38] sm:$0xff]
  %v1113 = vsel %vm56, %v1102, 0
  %1115 = vmatpush.msra.mxu0 0.0
  %1116 = vmatpush.msra.mxu0 0.0
  %1117 = vmatpush.msra.mxu0 0.0
  %1118 = vmatpush.msra.mxu0 0.0
  %1119 = vmatpush.msra.mxu0 0.0
  %1120 = vmatpush.msra.mxu0 0.0
  %1121 = vmatpush.msra.mxu0 0.0
  %1122 = vmatpush.msra.mxu0 0.0
  %1123 = vmatpush.msra.mxu0 %v1111
  %1124 = vmatpush.msra.mxu0 %v1110
  %1125 = vmatpush.msra.mxu0 %v1109
  %1126 = vmatpush.msra.mxu0 %v1108
  %1127 = vmatpush.msra.mxu0 %v1107
  %1128 = vmatpush.msra.mxu0 %v1106
  %1129 = vmatpush.msra.mxu0 %v1105
  %1130 = vmatpush.msra.mxu0 %v1104
  %1131 = vmatmul.f32.gmra.mxu0 %v1113
  %v1132 = vpop.f32.mrf.mxu0
  %v1133 = vadd.f32 0.0, %v1132
  %1134 = vdwg.mxu0
  %v1135 = vadd.f32 %v1100, %v1133
  %v1136 = vmax.f32 %v1101, %v1102
  %v1137 = vld [vmem:[%s835] sm:$0xff]
  %s1138 = scalar_lea.vmem %s5, 384
  %v1139 = vld [vmem:[%s1138] sm:$0xff]
  %v1140 = vld [vmem:[%s1138 + $0x8] sm:$0xff]
  %v1141 = vld [vmem:[%s1138 + $0x10] sm:$0xff]
  %v1142 = vld [vmem:[%s1138 + $0x18] sm:$0xff]
  %v1143 = vld [vmem:[%s1138 + $0x20] sm:$0xff]
  %v1144 = vld [vmem:[%s1138 + $0x28] sm:$0xff]
  %v1145 = vld [vmem:[%s1138 + $0x30] sm:$0xff]
  %v1146 = vld [vmem:[%s1138 + $0x38] sm:$0xff]
  %v1148 = vsel %vm56, %v1137, 0
  %1150 = vmatpush.msra.mxu0 0.0
  %1151 = vmatpush.msra.mxu0 0.0
  %1152 = vmatpush.msra.mxu0 0.0
  %1153 = vmatpush.msra.mxu0 0.0
  %1154 = vmatpush.msra.mxu0 0.0
  %1155 = vmatpush.msra.mxu0 0.0
  %1156 = vmatpush.msra.mxu0 0.0
  %1157 = vmatpush.msra.mxu0 0.0
  %1158 = vmatpush.msra.mxu0 %v1146
  %1159 = vmatpush.msra.mxu0 %v1145
  %1160 = vmatpush.msra.mxu0 %v1144
  %1161 = vmatpush.msra.mxu0 %v1143
  %1162 = vmatpush.msra.mxu0 %v1142
  %1163 = vmatpush.msra.mxu0 %v1141
  %1164 = vmatpush.msra.mxu0 %v1140
  %1165 = vmatpush.msra.mxu0 %v1139
  %1166 = vmatmul.f32.gmra.mxu0 %v1148
  %v1167 = vpop.f32.mrf.mxu0
  %v1168 = vadd.f32 0.0, %v1167
  %1169 = vdwg.mxu0
  %v1170 = vadd.f32 %v1135, %v1168
  %v1171 = vmax.f32 %v1136, %v1137
  %v1172 = vld [vmem:[%s929] sm:$0xff]
  %s1173 = scalar_lea.vmem %s5, 448
  %v1174 = vld [vmem:[%s1173] sm:$0xff]
  %v1175 = vld [vmem:[%s1173 + $0x8] sm:$0xff]
  %v1176 = vld [vmem:[%s1173 + $0x10] sm:$0xff]
  %v1177 = vld [vmem:[%s1173 + $0x18] sm:$0xff]
  %v1178 = vld [vmem:[%s1173 + $0x20] sm:$0xff]
  %v1179 = vld [vmem:[%s1173 + $0x28] sm:$0xff]
  %v1180 = vld [vmem:[%s1173 + $0x30] sm:$0xff]
  %v1181 = vld [vmem:[%s1173 + $0x38] sm:$0xff]
  %v1183 = vsel %vm56, %v1172, 0
  %1185 = vmatpush.msra.mxu0 0.0
  %1186 = vmatpush.msra.mxu0 0.0
  %1187 = vmatpush.msra.mxu0 0.0
  %1188 = vmatpush.msra.mxu0 0.0
  %1189 = vmatpush.msra.mxu0 0.0
  %1190 = vmatpush.msra.mxu0 0.0
  %1191 = vmatpush.msra.mxu0 0.0
  %1192 = vmatpush.msra.mxu0 0.0
  %1193 = vmatpush.msra.mxu0 %v1181
  %1194 = vmatpush.msra.mxu0 %v1180
  %1195 = vmatpush.msra.mxu0 %v1179
  %1196 = vmatpush.msra.mxu0 %v1178
  %1197 = vmatpush.msra.mxu0 %v1177
  %1198 = vmatpush.msra.mxu0 %v1176
  %1199 = vmatpush.msra.mxu0 %v1175
  %1200 = vmatpush.msra.mxu0 %v1174
  %1201 = vmatmul.f32.gmra.mxu0 %v1183
  %v1202 = vpop.f32.mrf.mxu0
  %v1203 = vadd.f32 0.0, %v1202
  %1204 = vdwg.mxu0
  %v1205 = vadd.f32 %v1170, %v1203
  %v1206 = vmax.f32 %v1171, %v1172
  %v1207 = vld [vmem:[%s6 + $0x5] sm:$0x1]
  %v1208 = vld [vmem:[%s6 + $0x6] sm:$0x1]
  %v1209 = vperm.slane %v1207, 0
  %1211 = vrot.lane.b32.xlu0 %v1209, 8
  %v1212 = vpop.permute.xlu0 %1211
  %v1214 = vadd.f32 %v1205, %v1212
  %v1215 = vtanh.pop %v1214
  %v1216 = vmul.f32 %v1215, 1.442695
  %v1217 = vpow.pop %v1216
  %v1218 = vld [vmem:[%s1] sm:$0xff]
  %1220 = vrot.lane.b32.xlu0 %v1218, 8
  %v1221 = vpop.permute.xlu0 %1220
  %v1223 = vmul.f32 %v1217, %v1221
  %1225 = vrot.lane.b32.xlu0 %v1223, 120
  %v1226 = vpop.permute.xlu0 %1225
  %vm1228 = vcmask 64512
  %v1229 = vsel %vm1228, %v1226, 0.0
  %1230 = vadd.xlane.f32.xlu0 %v1229
  %v1231 = vpop.xlane.xlu0 %1230
  %v1232 = vrcp.pop %v1231
  %v1233 = vmul.f32 %v1231, %v1232
  %v1234 = vsub.f32 1.0, %v1233
  %v1235 = vmul.f32 %v1232, %v1234
  %v1236 = vadd.f32 %v1232, %v1235
  %vm1237 = vweird.f32 %v1231
  %vm1238 = vweird.f32 %v1232
  %vm1239 = vmor %vm1237, %vm1238
  %v1240 = vsel %vm1239, %v1232, %v1236
  %v1241 = vand.u32 2147483647, %v1231
  %vm1242 = vcmp.eq.f32.partialorder %v1241, 8.507059e+37
  %v1243 = vand.u32 %v1231, 2147483648
  %v1244 = vor.u32 1.1754944e-38, %v1243
  %v1245 = vsel %vm1242, %v1244, %v1240
  %v1246 = vmul.f32 %v1223, %v1245
  %v1247 = vadd.f32 %v1246, 1e-10
  %v1248 = vlaneseq
  %v1249 = vand.u32 %v1248, 127
  %vm1250 = vcmp.lt.s32.totalorder %v1249, 32
  %v1251 = vsel %vm1250, 1, 0
  %v1252 = vcvt.s32.f32 %v1251
  %v1253 = vsub.f32 1.0, %v1252
  %1255 = vset.pattern.permute.xlu0 8
  %1256 = vperm.xlu0 %1255, %v1247
  %v1257 = vpop.permute.xlu0 %1256
  %v1259 = vmul.f32 %v1257, %v1252
  %1260 = vset.pattern.permute.xlu0 15
  %1261 = vperm.xlu0 %1260, %v1247
  %v1262 = vpop.permute.xlu0 %1261
  %v1264 = vmul.f32 %v1262, %v1253
  %v1265 = vadd.f32 %v1259, %v1264
  %v1266 = vmul.f32 %v931, %v1265
  %v1267 = vadd.f32 %v1266, 0.0
  %1268 = vset.pattern.permute.xlu0 9
  %1269 = vperm.xlu0 %1268, %v1247
  %v1270 = vpop.permute.xlu0 %1269
  %v1272 = vmul.f32 %v1270, %v1252
  %1273 = vset.pattern.permute.xlu0 14
  %1274 = vperm.xlu0 %1273, %v1247
  %v1275 = vpop.permute.xlu0 %1274
  %v1277 = vmul.f32 %v1275, %v1253
  %v1278 = vadd.f32 %v1272, %v1277
  %v1279 = vmul.f32 %v940, %v1278
  %v1280 = vadd.f32 %v1267, %v1279
  %1281 = vset.pattern.permute.xlu0 10
  %1282 = vperm.xlu0 %1281, %v1247
  %v1283 = vpop.permute.xlu0 %1282
  %v1285 = vmul.f32 %v1283, %v1252
  %1286 = vset.pattern.permute.xlu0 13
  %1287 = vperm.xlu0 %1286, %v1247
  %v1288 = vpop.permute.xlu0 %1287
  %v1290 = vmul.f32 %v1288, %v1253
  %v1291 = vadd.f32 %v1285, %v1290
  %v1292 = vmul.f32 %v997, %v1291
  %v1293 = vadd.f32 %v1280, %v1292
  %1294 = vset.pattern.permute.xlu0 11
  %1295 = vperm.xlu0 %1294, %v1247
  %v1296 = vpop.permute.xlu0 %1295
  %v1298 = vmul.f32 %v1296, %v1252
  %1299 = vset.pattern.permute.xlu0 12
  %1300 = vperm.xlu0 %1299, %v1247
  %v1301 = vpop.permute.xlu0 %1300
  %v1303 = vmul.f32 %v1301, %v1253
  %v1304 = vadd.f32 %v1298, %v1303
  %v1305 = vmul.f32 %v1032, %v1304
  %v1306 = vadd.f32 %v1293, %v1305
  %v1307 = vmul.f32 %v1301, %v1252
  %v1308 = vmul.f32 %v1296, %v1253
  %v1309 = vadd.f32 %v1307, %v1308
  %v1310 = vmul.f32 %v1067, %v1309
  %v1311 = vadd.f32 %v1306, %v1310
  %v1312 = vmul.f32 %v1288, %v1252
  %v1313 = vmul.f32 %v1283, %v1253
  %v1314 = vadd.f32 %v1312, %v1313
  %v1315 = vmul.f32 %v1102, %v1314
  %v1316 = vadd.f32 %v1311, %v1315
  %v1317 = vmul.f32 %v1275, %v1252
  %v1318 = vmul.f32 %v1270, %v1253
  %v1319 = vadd.f32 %v1317, %v1318
  %v1320 = vmul.f32 %v1137, %v1319
  %v1321 = vadd.f32 %v1316, %v1320
  %v1322 = vmul.f32 %v1262, %v1252
  %v1323 = vmul.f32 %v1257, %v1253
  %v1324 = vadd.f32 %v1322, %v1323
  %v1325 = vmul.f32 %v1172, %v1324
  %v1326 = vadd.f32 %v1321, %v1325
  %v1327 = vld [vmem:[%s6 + $0x2] sm:$0x1]
  %v1328 = vld [vmem:[%s6 + $0x3] sm:$0x1]
  %v1329 = vperm.slane %v1327, 0
  %v1330 = vmul.f32 %v1206, %v1329
  %v1331 = vperm.slane %v1328, 0
  %v1332 = vmul.f32 %v1326, %v1331
  %v1333 = vadd.f32 %v1330, %v1332
  %v1334 = vsel %vm56, %v1333, 0.0
  %1335 = vadd.xlane.f32.xlu0 %v1334
  %v1336 = vpop.xlane.xlu0 %1335
  %v1337 = vperm.slane %v1208, 0
  %v1338 = vadd.f32 %v1336, %v1337
  %vm1339 = vcmp.lt.s32.totalorder %v1249, 8
  %s1341 = vtos %v1208
  %v1342 = vstv %s1341
  %v1344 = vadd.f32 %v1205, %v1342
  %v1345 = vsel %vm1339, 1, 0
  %vm1346 = vcmp.eq.s32.totalorder %v1345, 1
  %v1347 = vsel %vm1346, %v1344, 0.0
  %vm1348 = vcmp.eq.s32.totalorder %v1249, 8
  %v1349 = vsel %vm1348, 1, 0
  %vm1350 = vcmp.eq.s32.totalorder %v1349, 1
  %1352 = vset.pattern.permute.xlu0 1
  %1353 = vperm.xlu0 %1352, %v1338
  %v1354 = vpop.permute.xlu0 %1353
  %v1356 = vsel %vm1350, %v1354, %v1347
  %1357 = vst [vmem:[%s7] sm:$0xff] %v1356
  // Predicated region
  $region30: #{penet_forward.1} parent=0 // pred_check
    _
  $region31: #{penet_forward.1} parent=0 // pred_check_branch
    %1359 = sbr.rel (0) target = $region33
  $region32: #{penet_forward.1} parent=0 // pred_region
    _
  $region33: #{penet_forward.1} parent=0 // pred_fallthru
    _
  // Predicated region
  $region34: #{penet_forward.1} parent=0 // pred_check
    _
  $region35: #{penet_forward.1} parent=0 // pred_check_branch
    %1361 = sbr.rel (0) target = $region37
  $region36: #{penet_forward.1} parent=0 // pred_region
    _
  $region37: #{penet_forward.1} parent=0 // pred_fallthru
    _

</llo_original>
